<compile_context>
chip_gen: v7x
topology: tpu7x:2x2x1
jax: 0.10.0
libtpu: 0.0.40
codegen_flags: <defaults>
</compile_context>

<pallas_src>
import functools

import jax
import jax.numpy as jnp
import numpy as np
from jax.experimental import pallas as pl
from jax.experimental.pallas import tpu as pltpu


def _conv3x3_boundary_masks(H, W):
    """[9, 1, H*W] {0,1} masks: mask[3*dy+dx, 0, p] == 1 iff the (dy-1, dx-1)
    neighbour of output pixel p lies inside the image (padding=1 conv)."""
    hh, ww = np.meshgrid(np.arange(H), np.arange(W), indexing="ij")
    hh = hh.reshape(-1)
    ww = ww.reshape(-1)
    m = np.zeros((9, 1, H * W), np.float32)
    for dy in range(3):
        for dx in range(3):
            ky, kx = dy - 1, dx - 1
            valid = ((hh + ky >= 0) & (hh + ky < H) &
                     (ww + kx >= 0) & (ww + kx < W))
            m[dy * 3 + dx, 0, :] = valid.astype(np.float32)
    return jnp.asarray(m)


def resblock_kernel(x_ref, w1_ref, w2_ref, bn_ref, mask_ref,
                    out_ref, blk_ref, *, H, W):
    """One batch element per grid step.

    x_ref   : [C, H*W]   image, channels on sublanes, flattened spatial on lanes
    w1_ref  : [9, C, C]  conv1 weights, tap-major ([tap, Cout, Cin])
    w2_ref  : [9, C, C]  conv2 weights
    bn_ref  : [C, 4]     columns: bn1_scale, bn1_shift, bn2_scale, bn2_shift
    mask_ref: [9, 1, H*W] conv boundary masks
    out_ref : [C, H*W]   module output == relu(x)
    blk_ref : [C, H*W]   block(x) + x  (the value the original forward discards)
    """
    HW = H * W
    x = x_ref[...]

    def conv3x3(inp, w_ref):
        acc = jnp.zeros(inp.shape, jnp.float32)
        for dy in range(3):
            for dx in range(3):
                tap = dy * 3 + dx
                ky, kx = dy - 1, dx - 1
                tap_w = w_ref[tap]                       # [Cout, Cin]
                if ky == 0 and kx == 0:
                    src = inp
                else:
                    # src[:, p] = inp[:, p + ky*W + kx], boundary-masked to 0.
                    shift = (-(ky * W + kx)) % HW
                    src = pltpu.roll(inp, shift, axis=1) * mask_ref[tap]
                acc = acc + jnp.dot(tap_w, src,
                                    preferred_element_type=jnp.float32)
        return acc

    # block = conv3x3 -> BN -> ReLU -> conv3x3 -> BN   (BN folded to scale/shift)
    h = conv3x3(x, w1_ref)
    h = h * bn_ref[:, 0:1] + bn_ref[:, 1:2]
    h = jnp.maximum(h, 0.0)
    h = conv3x3(h, w2_ref)
    h = h * bn_ref[:, 2:3] + bn_ref[:, 3:4]

    # out = block(x); out += residual   (computed, but the forward then discards it)
    blk_ref[...] = (h + x).astype(blk_ref.dtype)
    # out = self.relu(x)   <- the module's actual return value
    out_ref[...] = jnp.maximum(x, 0.0).astype(out_ref.dtype)


def resblock_forward(x, conv1_w, conv2_w,
                     bn1_scale, bn1_shift, bn2_scale, bn2_shift):
    """x: [B, C, H, W] NCHW f32.  conv*_w: [C, C, 3, 3] (PyTorch OIHW, bias-free).
    bn*_scale / bn*_shift: [C] folded inference-mode BatchNorm parameters
    (scale = gamma / sqrt(running_var + eps), shift = beta - running_mean * scale).

    Returns (out, block_out):
      out       == ResBlock.forward(x) == relu(x)  (the original forward overwrites
                   the block result with relu(x); reproduced exactly)
      block_out == bn2(conv2(relu(bn1(conv1(x))))) + x  (the conventional result)
    """
    B, C, H, W = x.shape
    HW = H * W

    x2 = x.reshape(B, C, HW)
    # [Cout, Cin, kh, kw] -> [kh*3 + kw, Cout, Cin]
    w1_t = jnp.transpose(conv1_w, (2, 3, 0, 1)).reshape(9, C, C)
    w2_t = jnp.transpose(conv2_w, (2, 3, 0, 1)).reshape(9, C, C)
    bn = jnp.stack([bn1_scale, bn1_shift, bn2_scale, bn2_shift], axis=1)  # [C, 4]
    masks = _conv3x3_boundary_masks(H, W)                                 # [9, 1, HW]

    out_shapes = (
        jax.ShapeDtypeStruct((B, C, HW), jnp.float32),   # relu(x)  (module output)
        jax.ShapeDtypeStruct((B, C, HW), jnp.float32),   # block(x) + x
    )

    kernel = pl.pallas_call(
        functools.partial(resblock_kernel, H=H, W=W),
        out_shape=out_shapes,
        grid_spec=pltpu.PrefetchScalarGridSpec(
            num_scalar_prefetch=0,
            grid=(B,),
            in_specs=[
                pl.BlockSpec((None, C, HW), lambda b: (b, 0, 0)),   # per-image x
                pl.BlockSpec((9, C, C), lambda b: (0, 0, 0)),       # conv1 w (resident)
                pl.BlockSpec((9, C, C), lambda b: (0, 0, 0)),       # conv2 w (resident)
                pl.BlockSpec((C, 4), lambda b: (0, 0)),             # BN scale/shift
                pl.BlockSpec((9, 1, HW), lambda b: (0, 0, 0)),      # boundary masks
            ],
            out_specs=[
                pl.BlockSpec((None, C, HW), lambda b: (b, 0, 0)),
                pl.BlockSpec((None, C, HW), lambda b: (b, 0, 0)),
            ],
        ),
        compiler_params=pltpu.CompilerParams(
            dimension_semantics=("parallel",)),   # batch steps shard across TCs (v7x)
    )
    out2, blk2 = kernel(x2, w1_t, w2_t, bn, masks)
    return out2.reshape(B, C, H, W), blk2.reshape(B, C, H, W)


if __name__ == "__main__":
    B, C, H, W = 2, 4, 16, 16

    key = jax.random.PRNGKey(0)
    ks = jax.random.split(key, 12)
    x = jax.random.normal(ks[0], (B, C, H, W), dtype=jnp.float32)
    conv1_w = jax.random.normal(ks[1], (C, C, 3, 3), dtype=jnp.float32) * 0.1
    conv2_w = jax.random.normal(ks[2], (C, C, 3, 3), dtype=jnp.float32) * 0.1

    # Inference-mode BatchNorm parameters, folded to per-channel scale/shift.
    eps = 1e-5
    gamma1 = 1.0 + 0.1 * jax.random.normal(ks[3], (C,), dtype=jnp.float32)
    beta1 = 0.1 * jax.random.normal(ks[4], (C,), dtype=jnp.float32)
    mean1 = 0.1 * jax.random.normal(ks[5], (C,), dtype=jnp.float32)
    var1 = 1.0 + 0.1 * jax.random.uniform(ks[6], (C,), dtype=jnp.float32)
    gamma2 = 1.0 + 0.1 * jax.random.normal(ks[7], (C,), dtype=jnp.float32)
    beta2 = 0.1 * jax.random.normal(ks[8], (C,), dtype=jnp.float32)
    mean2 = 0.1 * jax.random.normal(ks[9], (C,), dtype=jnp.float32)
    var2 = 1.0 + 0.1 * jax.random.uniform(ks[10], (C,), dtype=jnp.float32)

    bn1_scale = gamma1 / jnp.sqrt(var1 + eps)
    bn1_shift = beta1 - mean1 * bn1_scale
    bn2_scale = gamma2 / jnp.sqrt(var2 + eps)
    bn2_shift = beta2 - mean2 * bn2_scale

    out, block_out = resblock_forward(
        x, conv1_w, conv2_w, bn1_scale, bn1_shift, bn2_scale, bn2_shift)
    jax.block_until_ready((out, block_out))

    # Pure-JAX reference.
    def conv3x3_ref(inp, w):
        return jax.lax.conv_general_dilated(
            inp, w, window_strides=(1, 1), padding=((1, 1), (1, 1)),
            dimension_numbers=("NCHW", "OIHW", "NCHW"))

    h = conv3x3_ref(x, conv1_w)
    h = h * bn1_scale[None, :, None, None] + bn1_shift[None, :, None, None]
    h = jnp.maximum(h, 0.0)
    h = conv3x3_ref(h, conv2_w)
    h = h * bn2_scale[None, :, None, None] + bn2_shift[None, :, None, None]
    block_expected = h + x
    out_expected = jnp.maximum(x, 0.0)   # the original forward returns relu(x)

    assert jnp.allclose(out, out_expected, atol=1e-6), "module output (relu(x)) mismatch"
    # MXU/XLA default f32 matmul precision (bf16 passes) -> allow a loose tolerance.
    max_err = float(jnp.max(jnp.abs(block_out - block_expected)))
    assert jnp.allclose(block_out, block_expected, atol=2e-2, rtol=2e-2), (
        f"block(x)+x mismatch, max abs err {max_err}")

    print("KERNEL_OK")
</pallas_src>

<mosaic_0001>
module attributes {stable_mosaic.version = 11 : i64} {
  func.func @resblock_kernel(%arg0: i32, %arg1: memref<1x4x256xf32, #tpu.memory_space<vmem>>, %arg2: memref<9x4x4xf32, #tpu.memory_space<vmem>>, %arg3: memref<9x4x4xf32, #tpu.memory_space<vmem>>, %arg4: memref<4x4xf32, #tpu.memory_space<vmem>>, %arg5: memref<9x1x256xf32, #tpu.memory_space<vmem>>, %arg6: memref<1x4x256xf32, #tpu.memory_space<vmem>>, %arg7: memref<1x4x256xf32, #tpu.memory_space<vmem>>) attributes {dimension_semantics = [#tpu.dimension_semantics<parallel>], iteration_bounds = array<i64: 2>, scalar_prefetch = 0 : i64, scratch_operands = 0 : i64, tpu.core_type = #tpu.core_type<tc>, window_params = [{transform_indices = @transform_0, window_bounds = array<i64: 1, 4, 256>}, {pipeline_mode = #tpu.pipeline_mode<synchronous>, transform_indices = @transform_1, window_bounds = array<i64: 9, 4, 4>}, {pipeline_mode = #tpu.pipeline_mode<synchronous>, transform_indices = @transform_2, window_bounds = array<i64: 9, 4, 4>}, {pipeline_mode = #tpu.pipeline_mode<synchronous>, transform_indices = @transform_3, window_bounds = array<i64: 4, 4>}, {pipeline_mode = #tpu.pipeline_mode<synchronous>, transform_indices = @transform_4, window_bounds = array<i64: 9, 1, 256>}, {transform_indices = @transform_5, window_bounds = array<i64: 1, 4, 256>}, {transform_indices = @transform_6, window_bounds = array<i64: 1, 4, 256>}]} {
    %c0 = arith.constant 0 : index
    %c0_0 = arith.constant 0 : index
    %c0_1 = arith.constant 0 : index
    %0 = vector.load %arg1[%c0, %c0_0, %c0_1] : memref<1x4x256xf32, #tpu.memory_space<vmem>>, vector<1x4x256xf32>
    %1 = vector.shape_cast %0 : vector<1x4x256xf32> to vector<4x256xf32>
    %cst = arith.constant 0.000000e+00 : f32
    %2 = vector.broadcast %cst : f32 to vector<4x256xf32>
    %c0_2 = arith.constant 0 : index
    %c0_3 = arith.constant 0 : index
    %c0_4 = arith.constant 0 : index
    %3 = vector.load %arg2[%c0_2, %c0_3, %c0_4] : memref<9x4x4xf32, #tpu.memory_space<vmem>>, vector<1x4x4xf32>
    %4 = vector.shape_cast %3 : vector<1x4x4xf32> to vector<4x4xf32>
    %c17_i32 = arith.constant 17 : i32
    %5 = tpu.dynamic_rotate %1 by %c17_i32 dim 1 : vector<4x256xf32>, i32 -> vector<4x256xf32>
    %c0_5 = arith.constant 0 : index
    %c0_6 = arith.constant 0 : index
    %c0_7 = arith.constant 0 : index
    %6 = vector.load %arg5[%c0_5, %c0_6, %c0_7] : memref<9x1x256xf32, #tpu.memory_space<vmem>>, vector<1x1x256xf32>
    %7 = vector.shape_cast %6 : vector<1x1x256xf32> to vector<1x256xf32>
    %8 = vector.broadcast %7 : vector<1x256xf32> to vector<4x256xf32>
    %9 = arith.mulf %5, %8 : vector<4x256xf32>
    %cst_8 = arith.constant dense<0.000000e+00> : vector<4x256xf32>
    %10 = tpu.matmul %4, %9, %cst_8 {dimension_numbers = #tpu.dot_dimension_numbers<[1], [0], [0], [1], [0, 0, 1, 1], [], []>} : vector<4x4xf32>, vector<4x256xf32>, vector<4x256xf32> -> vector<4x256xf32>
    %11 = arith.addf %2, %10 : vector<4x256xf32>
    %c1 = arith.constant 1 : index
    %c0_9 = arith.constant 0 : index
    %c0_10 = arith.constant 0 : index
    %12 = vector.load %arg2[%c1, %c0_9, %c0_10] : memref<9x4x4xf32, #tpu.memory_space<vmem>>, vector<1x4x4xf32>
    %13 = vector.shape_cast %12 : vector<1x4x4xf32> to vector<4x4xf32>
    %c16_i32 = arith.constant 16 : i32
    %14 = tpu.dynamic_rotate %1 by %c16_i32 dim 1 : vector<4x256xf32>, i32 -> vector<4x256xf32>
    %c1_11 = arith.constant 1 : index
    %c0_12 = arith.constant 0 : index
    %c0_13 = arith.constant 0 : index
    %15 = vector.load %arg5[%c1_11, %c0_12, %c0_13] : memref<9x1x256xf32, #tpu.memory_space<vmem>>, vector<1x1x256xf32>
    %16 = vector.shape_cast %15 : vector<1x1x256xf32> to vector<1x256xf32>
    %17 = vector.broadcast %16 : vector<1x256xf32> to vector<4x256xf32>
    %18 = arith.mulf %14, %17 : vector<4x256xf32>
    %cst_14 = arith.constant dense<0.000000e+00> : vector<4x256xf32>
    %19 = tpu.matmul %13, %18, %cst_14 {dimension_numbers = #tpu.dot_dimension_numbers<[1], [0], [0], [1], [0, 0, 1, 1], [], []>} : vector<4x4xf32>, vector<4x256xf32>, vector<4x256xf32> -> vector<4x256xf32>
    %20 = arith.addf %11, %19 : vector<4x256xf32>
    %c2 = arith.constant 2 : index
    %c0_15 = arith.constant 0 : index
    %c0_16 = arith.constant 0 : index
    %21 = vector.load %arg2[%c2, %c0_15, %c0_16] : memref<9x4x4xf32, #tpu.memory_space<vmem>>, vector<1x4x4xf32>
    %22 = vector.shape_cast %21 : vector<1x4x4xf32> to vector<4x4xf32>
    %c15_i32 = arith.constant 15 : i32
    %23 = tpu.dynamic_rotate %1 by %c15_i32 dim 1 : vector<4x256xf32>, i32 -> vector<4x256xf32>
    %c2_17 = arith.constant 2 : index
    %c0_18 = arith.constant 0 : index
    %c0_19 = arith.constant 0 : index
    %24 = vector.load %arg5[%c2_17, %c0_18, %c0_19] : memref<9x1x256xf32, #tpu.memory_space<vmem>>, vector<1x1x256xf32>
    %25 = vector.shape_cast %24 : vector<1x1x256xf32> to vector<1x256xf32>
    %26 = vector.broadcast %25 : vector<1x256xf32> to vector<4x256xf32>
    %27 = arith.mulf %23, %26 : vector<4x256xf32>
    %cst_20 = arith.constant dense<0.000000e+00> : vector<4x256xf32>
    %28 = tpu.matmul %22, %27, %cst_20 {dimension_numbers = #tpu.dot_dimension_numbers<[1], [0], [0], [1], [0, 0, 1, 1], [], []>} : vector<4x4xf32>, vector<4x256xf32>, vector<4x256xf32> -> vector<4x256xf32>
    %29 = arith.addf %20, %28 : vector<4x256xf32>
    %c3 = arith.constant 3 : index
    %c0_21 = arith.constant 0 : index
    %c0_22 = arith.constant 0 : index
    %30 = vector.load %arg2[%c3, %c0_21, %c0_22] : memref<9x4x4xf32, #tpu.memory_space<vmem>>, vector<1x4x4xf32>
    %31 = vector.shape_cast %30 : vector<1x4x4xf32> to vector<4x4xf32>
    %c1_i32 = arith.constant 1 : i32
    %32 = tpu.dynamic_rotate %1 by %c1_i32 dim 1 : vector<4x256xf32>, i32 -> vector<4x256xf32>
    %c3_23 = arith.constant 3 : index
    %c0_24 = arith.constant 0 : index
    %c0_25 = arith.constant 0 : index
    %33 = vector.load %arg5[%c3_23, %c0_24, %c0_25] : memref<9x1x256xf32, #tpu.memory_space<vmem>>, vector<1x1x256xf32>
    %34 = vector.shape_cast %33 : vector<1x1x256xf32> to vector<1x256xf32>
    %35 = vector.broadcast %34 : vector<1x256xf32> to vector<4x256xf32>
    %36 = arith.mulf %32, %35 : vector<4x256xf32>
    %cst_26 = arith.constant dense<0.000000e+00> : vector<4x256xf32>
    %37 = tpu.matmul %31, %36, %cst_26 {dimension_numbers = #tpu.dot_dimension_numbers<[1], [0], [0], [1], [0, 0, 1, 1], [], []>} : vector<4x4xf32>, vector<4x256xf32>, vector<4x256xf32> -> vector<4x256xf32>
    %38 = arith.addf %29, %37 : vector<4x256xf32>
    %c4 = arith.constant 4 : index
    %c0_27 = arith.constant 0 : index
    %c0_28 = arith.constant 0 : index
    %39 = vector.load %arg2[%c4, %c0_27, %c0_28] : memref<9x4x4xf32, #tpu.memory_space<vmem>>, vector<1x4x4xf32>
    %40 = vector.shape_cast %39 : vector<1x4x4xf32> to vector<4x4xf32>
    %cst_29 = arith.constant dense<0.000000e+00> : vector<4x256xf32>
    %41 = tpu.matmul %40, %1, %cst_29 {dimension_numbers = #tpu.dot_dimension_numbers<[1], [0], [0], [1], [0, 0, 1, 1], [], []>} : vector<4x4xf32>, vector<4x256xf32>, vector<4x256xf32> -> vector<4x256xf32>
    %42 = arith.addf %38, %41 : vector<4x256xf32>
    %c5 = arith.constant 5 : index
    %c0_30 = arith.constant 0 : index
    %c0_31 = arith.constant 0 : index
    %43 = vector.load %arg2[%c5, %c0_30, %c0_31] : memref<9x4x4xf32, #tpu.memory_space<vmem>>, vector<1x4x4xf32>
    %44 = vector.shape_cast %43 : vector<1x4x4xf32> to vector<4x4xf32>
    %c255_i32 = arith.constant 255 : i32
    %45 = tpu.dynamic_rotate %1 by %c255_i32 dim 1 : vector<4x256xf32>, i32 -> vector<4x256xf32>
    %c5_32 = arith.constant 5 : index
    %c0_33 = arith.constant 0 : index
    %c0_34 = arith.constant 0 : index
    %46 = vector.load %arg5[%c5_32, %c0_33, %c0_34] : memref<9x1x256xf32, #tpu.memory_space<vmem>>, vector<1x1x256xf32>
    %47 = vector.shape_cast %46 : vector<1x1x256xf32> to vector<1x256xf32>
    %48 = vector.broadcast %47 : vector<1x256xf32> to vector<4x256xf32>
    %49 = arith.mulf %45, %48 : vector<4x256xf32>
    %cst_35 = arith.constant dense<0.000000e+00> : vector<4x256xf32>
    %50 = tpu.matmul %44, %49, %cst_35 {dimension_numbers = #tpu.dot_dimension_numbers<[1], [0], [0], [1], [0, 0, 1, 1], [], []>} : vector<4x4xf32>, vector<4x256xf32>, vector<4x256xf32> -> vector<4x256xf32>
    %51 = arith.addf %42, %50 : vector<4x256xf32>
    %c6 = arith.constant 6 : index
    %c0_36 = arith.constant 0 : index
    %c0_37 = arith.constant 0 : index
    %52 = vector.load %arg2[%c6, %c0_36, %c0_37] : memref<9x4x4xf32, #tpu.memory_space<vmem>>, vector<1x4x4xf32>
    %53 = vector.shape_cast %52 : vector<1x4x4xf32> to vector<4x4xf32>
    %c241_i32 = arith.constant 241 : i32
    %54 = tpu.dynamic_rotate %1 by %c241_i32 dim 1 : vector<4x256xf32>, i32 -> vector<4x256xf32>
    %c6_38 = arith.constant 6 : index
    %c0_39 = arith.constant 0 : index
    %c0_40 = arith.constant 0 : index
    %55 = vector.load %arg5[%c6_38, %c0_39, %c0_40] : memref<9x1x256xf32, #tpu.memory_space<vmem>>, vector<1x1x256xf32>
    %56 = vector.shape_cast %55 : vector<1x1x256xf32> to vector<1x256xf32>
    %57 = vector.broadcast %56 : vector<1x256xf32> to vector<4x256xf32>
    %58 = arith.mulf %54, %57 : vector<4x256xf32>
    %cst_41 = arith.constant dense<0.000000e+00> : vector<4x256xf32>
    %59 = tpu.matmul %53, %58, %cst_41 {dimension_numbers = #tpu.dot_dimension_numbers<[1], [0], [0], [1], [0, 0, 1, 1], [], []>} : vector<4x4xf32>, vector<4x256xf32>, vector<4x256xf32> -> vector<4x256xf32>
    %60 = arith.addf %51, %59 : vector<4x256xf32>
    %c7 = arith.constant 7 : index
    %c0_42 = arith.constant 0 : index
    %c0_43 = arith.constant 0 : index
    %61 = vector.load %arg2[%c7, %c0_42, %c0_43] : memref<9x4x4xf32, #tpu.memory_space<vmem>>, vector<1x4x4xf32>
    %62 = vector.shape_cast %61 : vector<1x4x4xf32> to vector<4x4xf32>
    %c240_i32 = arith.constant 240 : i32
    %63 = tpu.dynamic_rotate %1 by %c240_i32 dim 1 : vector<4x256xf32>, i32 -> vector<4x256xf32>
    %c7_44 = arith.constant 7 : index
    %c0_45 = arith.constant 0 : index
    %c0_46 = arith.constant 0 : index
    %64 = vector.load %arg5[%c7_44, %c0_45, %c0_46] : memref<9x1x256xf32, #tpu.memory_space<vmem>>, vector<1x1x256xf32>
    %65 = vector.shape_cast %64 : vector<1x1x256xf32> to vector<1x256xf32>
    %66 = vector.broadcast %65 : vector<1x256xf32> to vector<4x256xf32>
    %67 = arith.mulf %63, %66 : vector<4x256xf32>
    %cst_47 = arith.constant dense<0.000000e+00> : vector<4x256xf32>
    %68 = tpu.matmul %62, %67, %cst_47 {dimension_numbers = #tpu.dot_dimension_numbers<[1], [0], [0], [1], [0, 0, 1, 1], [], []>} : vector<4x4xf32>, vector<4x256xf32>, vector<4x256xf32> -> vector<4x256xf32>
    %69 = arith.addf %60, %68 : vector<4x256xf32>
    %c8 = arith.constant 8 : index
    %c0_48 = arith.constant 0 : index
    %c0_49 = arith.constant 0 : index
    %70 = vector.load %arg2[%c8, %c0_48, %c0_49] : memref<9x4x4xf32, #tpu.memory_space<vmem>>, vector<1x4x4xf32>
    %71 = vector.shape_cast %70 : vector<1x4x4xf32> to vector<4x4xf32>
    %c239_i32 = arith.constant 239 : i32
    %72 = tpu.dynamic_rotate %1 by %c239_i32 dim 1 : vector<4x256xf32>, i32 -> vector<4x256xf32>
    %c8_50 = arith.constant 8 : index
    %c0_51 = arith.constant 0 : index
    %c0_52 = arith.constant 0 : index
    %73 = vector.load %arg5[%c8_50, %c0_51, %c0_52] : memref<9x1x256xf32, #tpu.memory_space<vmem>>, vector<1x1x256xf32>
    %74 = vector.shape_cast %73 : vector<1x1x256xf32> to vector<1x256xf32>
    %75 = vector.broadcast %74 : vector<1x256xf32> to vector<4x256xf32>
    %76 = arith.mulf %72, %75 : vector<4x256xf32>
    %cst_53 = arith.constant dense<0.000000e+00> : vector<4x256xf32>
    %77 = tpu.matmul %71, %76, %cst_53 {dimension_numbers = #tpu.dot_dimension_numbers<[1], [0], [0], [1], [0, 0, 1, 1], [], []>} : vector<4x4xf32>, vector<4x256xf32>, vector<4x256xf32> -> vector<4x256xf32>
    %78 = arith.addf %69, %77 : vector<4x256xf32>
    %c0_54 = arith.constant 0 : index
    %c0_55 = arith.constant 0 : index
    %79 = vector.load %arg4[%c0_54, %c0_55] : memref<4x4xf32, #tpu.memory_space<vmem>>, vector<4x1xf32>
    %80 = vector.broadcast %79 : vector<4x1xf32> to vector<4x256xf32>
    %81 = arith.mulf %78, %80 : vector<4x256xf32>
    %c0_56 = arith.constant 0 : index
    %c1_57 = arith.constant 1 : index
    %82 = vector.load %arg4[%c0_56, %c1_57] : memref<4x4xf32, #tpu.memory_space<vmem>>, vector<4x1xf32>
    %83 = vector.broadcast %82 : vector<4x1xf32> to vector<4x256xf32>
    %84 = arith.addf %81, %83 : vector<4x256xf32>
    %cst_58 = arith.constant 0.000000e+00 : f32
    %85 = vector.broadcast %cst_58 : f32 to vector<4x256xf32>
    %86 = arith.maximumf %84, %85 : vector<4x256xf32>
    %cst_59 = arith.constant 0.000000e+00 : f32
    %87 = vector.broadcast %cst_59 : f32 to vector<4x256xf32>
    %c0_60 = arith.constant 0 : index
    %c0_61 = arith.constant 0 : index
    %c0_62 = arith.constant 0 : index
    %88 = vector.load %arg3[%c0_60, %c0_61, %c0_62] : memref<9x4x4xf32, #tpu.memory_space<vmem>>, vector<1x4x4xf32>
    %89 = vector.shape_cast %88 : vector<1x4x4xf32> to vector<4x4xf32>
    %c17_i32_63 = arith.constant 17 : i32
    %90 = tpu.dynamic_rotate %86 by %c17_i32_63 dim 1 : vector<4x256xf32>, i32 -> vector<4x256xf32>
    %c0_64 = arith.constant 0 : index
    %c0_65 = arith.constant 0 : index
    %c0_66 = arith.constant 0 : index
    %91 = vector.load %arg5[%c0_64, %c0_65, %c0_66] : memref<9x1x256xf32, #tpu.memory_space<vmem>>, vector<1x1x256xf32>
    %92 = vector.shape_cast %91 : vector<1x1x256xf32> to vector<1x256xf32>
    %93 = vector.broadcast %92 : vector<1x256xf32> to vector<4x256xf32>
    %94 = arith.mulf %90, %93 : vector<4x256xf32>
    %cst_67 = arith.constant dense<0.000000e+00> : vector<4x256xf32>
    %95 = tpu.matmul %89, %94, %cst_67 {dimension_numbers = #tpu.dot_dimension_numbers<[1], [0], [0], [1], [0, 0, 1, 1], [], []>} : vector<4x4xf32>, vector<4x256xf32>, vector<4x256xf32> -> vector<4x256xf32>
    %96 = arith.addf %87, %95 : vector<4x256xf32>
    %c1_68 = arith.constant 1 : index
    %c0_69 = arith.constant 0 : index
    %c0_70 = arith.constant 0 : index
    %97 = vector.load %arg3[%c1_68, %c0_69, %c0_70] : memref<9x4x4xf32, #tpu.memory_space<vmem>>, vector<1x4x4xf32>
    %98 = vector.shape_cast %97 : vector<1x4x4xf32> to vector<4x4xf32>
    %c16_i32_71 = arith.constant 16 : i32
    %99 = tpu.dynamic_rotate %86 by %c16_i32_71 dim 1 : vector<4x256xf32>, i32 -> vector<4x256xf32>
    %c1_72 = arith.constant 1 : index
    %c0_73 = arith.constant 0 : index
    %c0_74 = arith.constant 0 : index
    %100 = vector.load %arg5[%c1_72, %c0_73, %c0_74] : memref<9x1x256xf32, #tpu.memory_space<vmem>>, vector<1x1x256xf32>
    %101 = vector.shape_cast %100 : vector<1x1x256xf32> to vector<1x256xf32>
    %102 = vector.broadcast %101 : vector<1x256xf32> to vector<4x256xf32>
    %103 = arith.mulf %99, %102 : vector<4x256xf32>
    %cst_75 = arith.constant dense<0.000000e+00> : vector<4x256xf32>
    %104 = tpu.matmul %98, %103, %cst_75 {dimension_numbers = #tpu.dot_dimension_numbers<[1], [0], [0], [1], [0, 0, 1, 1], [], []>} : vector<4x4xf32>, vector<4x256xf32>, vector<4x256xf32> -> vector<4x256xf32>
    %105 = arith.addf %96, %104 : vector<4x256xf32>
    %c2_76 = arith.constant 2 : index
    %c0_77 = arith.constant 0 : index
    %c0_78 = arith.constant 0 : index
    %106 = vector.load %arg3[%c2_76, %c0_77, %c0_78] : memref<9x4x4xf32, #tpu.memory_space<vmem>>, vector<1x4x4xf32>
    %107 = vector.shape_cast %106 : vector<1x4x4xf32> to vector<4x4xf32>
    %c15_i32_79 = arith.constant 15 : i32
    %108 = tpu.dynamic_rotate %86 by %c15_i32_79 dim 1 : vector<4x256xf32>, i32 -> vector<4x256xf32>
    %c2_80 = arith.constant 2 : index
    %c0_81 = arith.constant 0 : index
    %c0_82 = arith.constant 0 : index
    %109 = vector.load %arg5[%c2_80, %c0_81, %c0_82] : memref<9x1x256xf32, #tpu.memory_space<vmem>>, vector<1x1x256xf32>
    %110 = vector.shape_cast %109 : vector<1x1x256xf32> to vector<1x256xf32>
    %111 = vector.broadcast %110 : vector<1x256xf32> to vector<4x256xf32>
    %112 = arith.mulf %108, %111 : vector<4x256xf32>
    %cst_83 = arith.constant dense<0.000000e+00> : vector<4x256xf32>
    %113 = tpu.matmul %107, %112, %cst_83 {dimension_numbers = #tpu.dot_dimension_numbers<[1], [0], [0], [1], [0, 0, 1, 1], [], []>} : vector<4x4xf32>, vector<4x256xf32>, vector<4x256xf32> -> vector<4x256xf32>
    %114 = arith.addf %105, %113 : vector<4x256xf32>
    %c3_84 = arith.constant 3 : index
    %c0_85 = arith.constant 0 : index
    %c0_86 = arith.constant 0 : index
    %115 = vector.load %arg3[%c3_84, %c0_85, %c0_86] : memref<9x4x4xf32, #tpu.memory_space<vmem>>, vector<1x4x4xf32>
    %116 = vector.shape_cast %115 : vector<1x4x4xf32> to vector<4x4xf32>
    %c1_i32_87 = arith.constant 1 : i32
    %117 = tpu.dynamic_rotate %86 by %c1_i32_87 dim 1 : vector<4x256xf32>, i32 -> vector<4x256xf32>
    %c3_88 = arith.constant 3 : index
    %c0_89 = arith.constant 0 : index
    %c0_90 = arith.constant 0 : index
    %118 = vector.load %arg5[%c3_88, %c0_89, %c0_90] : memref<9x1x256xf32, #tpu.memory_space<vmem>>, vector<1x1x256xf32>
    %119 = vector.shape_cast %118 : vector<1x1x256xf32> to vector<1x256xf32>
    %120 = vector.broadcast %119 : vector<1x256xf32> to vector<4x256xf32>
    %121 = arith.mulf %117, %120 : vector<4x256xf32>
    %cst_91 = arith.constant dense<0.000000e+00> : vector<4x256xf32>
    %122 = tpu.matmul %116, %121, %cst_91 {dimension_numbers = #tpu.dot_dimension_numbers<[1], [0], [0], [1], [0, 0, 1, 1], [], []>} : vector<4x4xf32>, vector<4x256xf32>, vector<4x256xf32> -> vector<4x256xf32>
    %123 = arith.addf %114, %122 : vector<4x256xf32>
    %c4_92 = arith.constant 4 : index
    %c0_93 = arith.constant 0 : index
    %c0_94 = arith.constant 0 : index
    %124 = vector.load %arg3[%c4_92, %c0_93, %c0_94] : memref<9x4x4xf32, #tpu.memory_space<vmem>>, vector<1x4x4xf32>
    %125 = vector.shape_cast %124 : vector<1x4x4xf32> to vector<4x4xf32>
    %cst_95 = arith.constant dense<0.000000e+00> : vector<4x256xf32>
    %126 = tpu.matmul %125, %86, %cst_95 {dimension_numbers = #tpu.dot_dimension_numbers<[1], [0], [0], [1], [0, 0, 1, 1], [], []>} : vector<4x4xf32>, vector<4x256xf32>, vector<4x256xf32> -> vector<4x256xf32>
    %127 = arith.addf %123, %126 : vector<4x256xf32>
    %c5_96 = arith.constant 5 : index
    %c0_97 = arith.constant 0 : index
    %c0_98 = arith.constant 0 : index
    %128 = vector.load %arg3[%c5_96, %c0_97, %c0_98] : memref<9x4x4xf32, #tpu.memory_space<vmem>>, vector<1x4x4xf32>
    %129 = vector.shape_cast %128 : vector<1x4x4xf32> to vector<4x4xf32>
    %c255_i32_99 = arith.constant 255 : i32
    %130 = tpu.dynamic_rotate %86 by %c255_i32_99 dim 1 : vector<4x256xf32>, i32 -> vector<4x256xf32>
    %c5_100 = arith.constant 5 : index
    %c0_101 = arith.constant 0 : index
    %c0_102 = arith.constant 0 : index
    %131 = vector.load %arg5[%c5_100, %c0_101, %c0_102] : memref<9x1x256xf32, #tpu.memory_space<vmem>>, vector<1x1x256xf32>
    %132 = vector.shape_cast %131 : vector<1x1x256xf32> to vector<1x256xf32>
    %133 = vector.broadcast %132 : vector<1x256xf32> to vector<4x256xf32>
    %134 = arith.mulf %130, %133 : vector<4x256xf32>
    %cst_103 = arith.constant dense<0.000000e+00> : vector<4x256xf32>
    %135 = tpu.matmul %129, %134, %cst_103 {dimension_numbers = #tpu.dot_dimension_numbers<[1], [0], [0], [1], [0, 0, 1, 1], [], []>} : vector<4x4xf32>, vector<4x256xf32>, vector<4x256xf32> -> vector<4x256xf32>
    %136 = arith.addf %127, %135 : vector<4x256xf32>
    %c6_104 = arith.constant 6 : index
    %c0_105 = arith.constant 0 : index
    %c0_106 = arith.constant 0 : index
    %137 = vector.load %arg3[%c6_104, %c0_105, %c0_106] : memref<9x4x4xf32, #tpu.memory_space<vmem>>, vector<1x4x4xf32>
    %138 = vector.shape_cast %137 : vector<1x4x4xf32> to vector<4x4xf32>
    %c241_i32_107 = arith.constant 241 : i32
    %139 = tpu.dynamic_rotate %86 by %c241_i32_107 dim 1 : vector<4x256xf32>, i32 -> vector<4x256xf32>
    %c6_108 = arith.constant 6 : index
    %c0_109 = arith.constant 0 : index
    %c0_110 = arith.constant 0 : index
    %140 = vector.load %arg5[%c6_108, %c0_109, %c0_110] : memref<9x1x256xf32, #tpu.memory_space<vmem>>, vector<1x1x256xf32>
    %141 = vector.shape_cast %140 : vector<1x1x256xf32> to vector<1x256xf32>
    %142 = vector.broadcast %141 : vector<1x256xf32> to vector<4x256xf32>
    %143 = arith.mulf %139, %142 : vector<4x256xf32>
    %cst_111 = arith.constant dense<0.000000e+00> : vector<4x256xf32>
    %144 = tpu.matmul %138, %143, %cst_111 {dimension_numbers = #tpu.dot_dimension_numbers<[1], [0], [0], [1], [0, 0, 1, 1], [], []>} : vector<4x4xf32>, vector<4x256xf32>, vector<4x256xf32> -> vector<4x256xf32>
    %145 = arith.addf %136, %144 : vector<4x256xf32>
    %c7_112 = arith.constant 7 : index
    %c0_113 = arith.constant 0 : index
    %c0_114 = arith.constant 0 : index
    %146 = vector.load %arg3[%c7_112, %c0_113, %c0_114] : memref<9x4x4xf32, #tpu.memory_space<vmem>>, vector<1x4x4xf32>
    %147 = vector.shape_cast %146 : vector<1x4x4xf32> to vector<4x4xf32>
    %c240_i32_115 = arith.constant 240 : i32
    %148 = tpu.dynamic_rotate %86 by %c240_i32_115 dim 1 : vector<4x256xf32>, i32 -> vector<4x256xf32>
    %c7_116 = arith.constant 7 : index
    %c0_117 = arith.constant 0 : index
    %c0_118 = arith.constant 0 : index
    %149 = vector.load %arg5[%c7_116, %c0_117, %c0_118] : memref<9x1x256xf32, #tpu.memory_space<vmem>>, vector<1x1x256xf32>
    %150 = vector.shape_cast %149 : vector<1x1x256xf32> to vector<1x256xf32>
    %151 = vector.broadcast %150 : vector<1x256xf32> to vector<4x256xf32>
    %152 = arith.mulf %148, %151 : vector<4x256xf32>
    %cst_119 = arith.constant dense<0.000000e+00> : vector<4x256xf32>
    %153 = tpu.matmul %147, %152, %cst_119 {dimension_numbers = #tpu.dot_dimension_numbers<[1], [0], [0], [1], [0, 0, 1, 1], [], []>} : vector<4x4xf32>, vector<4x256xf32>, vector<4x256xf32> -> vector<4x256xf32>
    %154 = arith.addf %145, %153 : vector<4x256xf32>
    %c8_120 = arith.constant 8 : index
    %c0_121 = arith.constant 0 : index
    %c0_122 = arith.constant 0 : index
    %155 = vector.load %arg3[%c8_120, %c0_121, %c0_122] : memref<9x4x4xf32, #tpu.memory_space<vmem>>, vector<1x4x4xf32>
    %156 = vector.shape_cast %155 : vector<1x4x4xf32> to vector<4x4xf32>
    %c239_i32_123 = arith.constant 239 : i32
    %157 = tpu.dynamic_rotate %86 by %c239_i32_123 dim 1 : vector<4x256xf32>, i32 -> vector<4x256xf32>
    %c8_124 = arith.constant 8 : index
    %c0_125 = arith.constant 0 : index
    %c0_126 = arith.constant 0 : index
    %158 = vector.load %arg5[%c8_124, %c0_125, %c0_126] : memref<9x1x256xf32, #tpu.memory_space<vmem>>, vector<1x1x256xf32>
    %159 = vector.shape_cast %158 : vector<1x1x256xf32> to vector<1x256xf32>
    %160 = vector.broadcast %159 : vector<1x256xf32> to vector<4x256xf32>
    %161 = arith.mulf %157, %160 : vector<4x256xf32>
    %cst_127 = arith.constant dense<0.000000e+00> : vector<4x256xf32>
    %162 = tpu.matmul %156, %161, %cst_127 {dimension_numbers = #tpu.dot_dimension_numbers<[1], [0], [0], [1], [0, 0, 1, 1], [], []>} : vector<4x4xf32>, vector<4x256xf32>, vector<4x256xf32> -> vector<4x256xf32>
    %163 = arith.addf %154, %162 : vector<4x256xf32>
    %c0_128 = arith.constant 0 : index
    %c2_129 = arith.constant 2 : index
    %164 = vector.load %arg4[%c0_128, %c2_129] : memref<4x4xf32, #tpu.memory_space<vmem>>, vector<4x1xf32>
    %165 = vector.broadcast %164 : vector<4x1xf32> to vector<4x256xf32>
    %166 = arith.mulf %163, %165 : vector<4x256xf32>
    %c0_130 = arith.constant 0 : index
    %c3_131 = arith.constant 3 : index
    %167 = vector.load %arg4[%c0_130, %c3_131] : memref<4x4xf32, #tpu.memory_space<vmem>>, vector<4x1xf32>
    %168 = vector.broadcast %167 : vector<4x1xf32> to vector<4x256xf32>
    %169 = arith.addf %166, %168 : vector<4x256xf32>
    %170 = arith.addf %169, %1 : vector<4x256xf32>
    %c0_132 = arith.constant 0 : index
    %c0_133 = arith.constant 0 : index
    %c0_134 = arith.constant 0 : index
    %171 = vector.load %arg7[%c0_132, %c0_133, %c0_134] : memref<1x4x256xf32, #tpu.memory_space<vmem>>, vector<1x4x256xf32>
    %172 = vector.shape_cast %171 : vector<1x4x256xf32> to vector<4x256xf32>
    %173 = vector.shape_cast %170 : vector<4x256xf32> to vector<1x4x256xf32>
    tpu.vector_store %arg7[%c0_132, %c0_133, %c0_134], %173 {strides = array<i32>} : memref<1x4x256xf32, #tpu.memory_space<vmem>>, vector<1x4x256xf32>,
    %cst_135 = arith.constant 0.000000e+00 : f32
    %174 = vector.broadcast %cst_135 : f32 to vector<4x256xf32>
    %175 = arith.maximumf %1, %174 : vector<4x256xf32>
    %c0_136 = arith.constant 0 : index
    %c0_137 = arith.constant 0 : index
    %c0_138 = arith.constant 0 : index
    %176 = vector.load %arg6[%c0_136, %c0_137, %c0_138] : memref<1x4x256xf32, #tpu.memory_space<vmem>>, vector<1x4x256xf32>
    %177 = vector.shape_cast %176 : vector<1x4x256xf32> to vector<4x256xf32>
    %178 = vector.shape_cast %175 : vector<4x256xf32> to vector<1x4x256xf32>
    tpu.vector_store %arg6[%c0_136, %c0_137, %c0_138], %178 {strides = array<i32>} : memref<1x4x256xf32, #tpu.memory_space<vmem>>, vector<1x4x256xf32>,
    return
  }
  func.func @transform_0(%arg0: i32) -> (i32, i32, i32) {
    %c0_i32 = arith.constant 0 : i32
    %c0_i32_0 = arith.constant 0 : i32
    %c0_i32_1 = arith.constant 0 : i32
    return %arg0, %c0_i32, %c0_i32_0 : i32, i32, i32
  }
  func.func @transform_1(%arg0: i32) -> (i32, i32, i32) {
    %c0_i32 = arith.constant 0 : i32
    %c0_i32_0 = arith.constant 0 : i32
    %c0_i32_1 = arith.constant 0 : i32
    %c0_i32_2 = arith.constant 0 : i32
    return %c0_i32, %c0_i32_0, %c0_i32_1 : i32, i32, i32
  }
  func.func @transform_2(%arg0: i32) -> (i32, i32, i32) {
    %c0_i32 = arith.constant 0 : i32
    %c0_i32_0 = arith.constant 0 : i32
    %c0_i32_1 = arith.constant 0 : i32
    %c0_i32_2 = arith.constant 0 : i32
    return %c0_i32, %c0_i32_0, %c0_i32_1 : i32, i32, i32
  }
  func.func @transform_3(%arg0: i32) -> (i32, i32) {
    %c0_i32 = arith.constant 0 : i32
    %c0_i32_0 = arith.constant 0 : i32
    %c0_i32_1 = arith.constant 0 : i32
    return %c0_i32, %c0_i32_0 : i32, i32
  }
  func.func @transform_4(%arg0: i32) -> (i32, i32, i32) {
    %c0_i32 = arith.constant 0 : i32
    %c0_i32_0 = arith.constant 0 : i32
    %c0_i32_1 = arith.constant 0 : i32
    %c0_i32_2 = arith.constant 0 : i32
    return %c0_i32, %c0_i32_0, %c0_i32_1 : i32, i32, i32
  }
  func.func @transform_5(%arg0: i32) -> (i32, i32, i32) {
    %c0_i32 = arith.constant 0 : i32
    %c0_i32_0 = arith.constant 0 : i32
    %c0_i32_1 = arith.constant 0 : i32
    return %arg0, %c0_i32, %c0_i32_0 : i32, i32, i32
  }
  func.func @transform_6(%arg0: i32) -> (i32, i32, i32) {
    %c0_i32 = arith.constant 0 : i32
    %c0_i32_0 = arith.constant 0 : i32
    %c0_i32_1 = arith.constant 0 : i32
    return %arg0, %c0_i32, %c0_i32_0 : i32, i32, i32
  }
}

</mosaic_0001>

<llo_original>
// kernel: tpu_custom_call.1
$region0: #{tpu_custom_call.1}
  #allocation0 [shape = 'u32[]', space=smem, size = 0x4, offset = 0x4, fixed_abs, tag = 'smem constant byte address 0x4 - core index']
  #allocation1 [shape = 'u32[144,128]{1,0:T(1,128)}', space=vmem, size = 0x12000, scoped, tag = 'internal scratch']
  %s0 = inlined_call_operand.vmem [shape: f32[2,4,256], index: 0, kind: input, shape index: {}]
  %s1 = inlined_call_operand.vmem [shape: f32[9,4,4], index: 1, kind: input, shape index: {}]
  %s2 = inlined_call_operand.vmem [shape: f32[9,4,4], index: 2, kind: input, shape index: {}]
  %s3 = inlined_call_operand.vmem [shape: f32[4,4], index: 3, kind: input, shape index: {}]
  %s4 = inlined_call_operand.vmem [shape: f32[9,1,256], index: 4, kind: input, shape index: {}]
  %s5 = inlined_call_operand.hbm [shape: f32[2,4,256], index: 5, kind: output, shape index: {0}]
  %s6 = inlined_call_operand.hbm [shape: f32[2,4,256], index: 6, kind: output, shape index: {1}]
  %7 = xla_tuple %s5, %s6
  %s8 = sld [smem:[#allocation0]]
  $region61: #{tpu_custom_call.1} parent=0
    _
  %s10 = ssub.s32 1, %s8
  %s11 = scalar_select 0, %s10, %s8
  $region1: #{tpu_custom_call.1} parent=0
    #allocation2 [shape = 'u8[8192]{0}', space=vmem, size = 0x2000, scoped, tag = 'output window, operand 0']
    #allocation3 [shape = 's32[2]{0}', space=sflag, size = 0x8, scoped, tag = 'scoped memory for tpu_custom_call.1']
    #allocation4 [shape = 'u8[8192]{0}', space=vmem, size = 0x2000, scoped, tag = 'output window, operand 1']
    #allocation5 [shape = 's32[2]{0}', space=sflag, size = 0x8, scoped, tag = 'scoped memory for tpu_custom_call.1']
    %12 = vsyncpa [#allocation3], 0
    %s13 = scalar_lea.sflag [#allocation3], 1
    %14 = vsyncpa %s13, 0
    %15 = vsyncpa [#allocation5], 0
    %s16 = scalar_lea.sflag [#allocation5], 1
    %17 = vsyncpa %s16, 0
    loop: start=0, step=1, limit=4
    $region2: #{tpu_custom_call.1} parent=1 // loop_pre_header
      _
    $region3: #{tpu_custom_call.1} parent=1 // loop_header
      %s19 = sphi 0, %s23
      %p20 = scmp.ge.s32.totalorder %s19, 4
      %s29 = sphi 0, %s31
      %s32 = sphi 0, %s29
      %s33 = sphi 0, %s32
      %s49 = sphi 0, %s33
      %s53 = sphi 0, %s53
      %s55 = sphi 0, %s53
      %s56 = sphi 0, %s55
      %s70 = sphi 0, %s56
      %s74 = sphi 0, %s74
      %s76 = sphi 0, %s74
      %s77 = sphi 0, %s76
      %s91 = sphi 0, %s77
      %s95 = sphi 0, %s95
      %s97 = sphi 0, %s95
      %s98 = sphi 0, %s97
      %s112 = sphi 0, %s98
      %s116 = sphi 0, %s116
      %s118 = sphi 0, %s116
      %s119 = sphi 0, %s118
      %s133 = sphi 0, %s119
      %s139 = sphi 0, %s141
      %s142 = sphi 0, %s139
      %s143 = sphi 0, %s142
      %s159 = sphi 0, %s143
      %s165 = sphi 0, %s167
      %s168 = sphi 0, %s165
      %s169 = sphi 0, %s168
      %s185 = sphi 0, %s169
    $region4: #{tpu_custom_call.1} parent=1 // loop_header_branch
      %22 = sbr.rel (%p20) target = $region8
    $region5: #{tpu_custom_call.1} parent=1 // loop_body
      %s24 = ssub.s32 %s19, 1
      %s25 = ssub.s32 %s19, 2
      %s26 = sadd.s32 %s19, 1
      %s27 = ssub.s32 %s19, %s26
      %p28 = scmp.eq.s32.totalorder %s27, 0
      %s30 = sadd.s32 %s29, 1
      %s31 = scalar_select %p28, %s29, %s30
      %p34 = pneg %p28
      %p35 = scmp.eq.s32.totalorder %s19, 1
      %p36 = por %p34, %p35
      %p37 = scmp.ne.s32.totalorder %s29, %s32
      %p38 = scmp.eq.s32.totalorder %s19, 0
      %p39 = por %p37, %p38
      %p40 = scmp.ne.s32.totalorder %s29, %s32
      %p41 = scmp.eq.s32.totalorder %s24, 1
      %p42 = por %p40, %p41
      %p43 = scmp.ne.s32.totalorder %s32, %s33
      %p44 = scmp.eq.s32.totalorder %s24, 0
      %p45 = por %p43, %p44
      %p46 = scmp.ne.s32.totalorder %s32, %s33
      %p47 = scmp.eq.s32.totalorder %s25, 1
      %p48 = por %p46, %p47
      %p50 = scmp.ne.s32.totalorder %s33, %s49
      %p51 = scmp.eq.s32.totalorder %s25, 0
      %p52 = por %p50, %p51
      %s54 = sadd.s32 %s53, 1
      %p57 = scmp.eq.s32.totalorder %s19, 1
      %p58 = scmp.ne.s32.totalorder %s53, %s55
      %p59 = scmp.eq.s32.totalorder %s19, 0
      %p60 = por %p58, %p59
      %p61 = scmp.ne.s32.totalorder %s53, %s55
      %p62 = scmp.eq.s32.totalorder %s24, 1
      %p63 = por %p61, %p62
      %p64 = scmp.ne.s32.totalorder %s55, %s56
      %p65 = scmp.eq.s32.totalorder %s24, 0
      %p66 = por %p64, %p65
      %p67 = scmp.ne.s32.totalorder %s55, %s56
      %p68 = scmp.eq.s32.totalorder %s25, 1
      %p69 = por %p67, %p68
      %p71 = scmp.ne.s32.totalorder %s56, %s70
      %p72 = scmp.eq.s32.totalorder %s25, 0
      %p73 = por %p71, %p72
      %s75 = sadd.s32 %s74, 1
      %p78 = scmp.eq.s32.totalorder %s19, 1
      %p79 = scmp.ne.s32.totalorder %s74, %s76
      %p80 = scmp.eq.s32.totalorder %s19, 0
      %p81 = por %p79, %p80
      %p82 = scmp.ne.s32.totalorder %s74, %s76
      %p83 = scmp.eq.s32.totalorder %s24, 1
      %p84 = por %p82, %p83
      %p85 = scmp.ne.s32.totalorder %s76, %s77
      %p86 = scmp.eq.s32.totalorder %s24, 0
      %p87 = por %p85, %p86
      %p88 = scmp.ne.s32.totalorder %s76, %s77
      %p89 = scmp.eq.s32.totalorder %s25, 1
      %p90 = por %p88, %p89
      %p92 = scmp.ne.s32.totalorder %s77, %s91
      %p93 = scmp.eq.s32.totalorder %s25, 0
      %p94 = por %p92, %p93
      %s96 = sadd.s32 %s95, 1
      %p99 = scmp.eq.s32.totalorder %s19, 1
      %p100 = scmp.ne.s32.totalorder %s95, %s97
      %p101 = scmp.eq.s32.totalorder %s19, 0
      %p102 = por %p100, %p101
      %p103 = scmp.ne.s32.totalorder %s95, %s97
      %p104 = scmp.eq.s32.totalorder %s24, 1
      %p105 = por %p103, %p104
      %p106 = scmp.ne.s32.totalorder %s97, %s98
      %p107 = scmp.eq.s32.totalorder %s24, 0
      %p108 = por %p106, %p107
      %p109 = scmp.ne.s32.totalorder %s97, %s98
      %p110 = scmp.eq.s32.totalorder %s25, 1
      %p111 = por %p109, %p110
      %p113 = scmp.ne.s32.totalorder %s98, %s112
      %p114 = scmp.eq.s32.totalorder %s25, 0
      %p115 = por %p113, %p114
      %s117 = sadd.s32 %s116, 1
      %p120 = scmp.eq.s32.totalorder %s19, 1
      %p121 = scmp.ne.s32.totalorder %s116, %s118
      %p122 = scmp.eq.s32.totalorder %s19, 0
      %p123 = por %p121, %p122
      %p124 = scmp.ne.s32.totalorder %s116, %s118
      %p125 = scmp.eq.s32.totalorder %s24, 1
      %p126 = por %p124, %p125
      %p127 = scmp.ne.s32.totalorder %s118, %s119
      %p128 = scmp.eq.s32.totalorder %s24, 0
      %p129 = por %p127, %p128
      %p130 = scmp.ne.s32.totalorder %s118, %s119
      %p131 = scmp.eq.s32.totalorder %s25, 1
      %p132 = por %p130, %p131
      %p134 = scmp.ne.s32.totalorder %s119, %s133
      %p135 = scmp.eq.s32.totalorder %s25, 0
      %p136 = por %p134, %p135
      %s137 = ssub.s32 %s19, %s26
      %p138 = scmp.eq.s32.totalorder %s137, 0
      %s140 = sadd.s32 %s139, 1
      %s141 = scalar_select %p138, %s139, %s140
      %p144 = pneg %p138
      %p145 = scmp.eq.s32.totalorder %s19, 1
      %p146 = por %p144, %p145
      %p147 = scmp.ne.s32.totalorder %s139, %s142
      %p148 = scmp.eq.s32.totalorder %s19, 0
      %p149 = por %p147, %p148
      %p150 = scmp.ne.s32.totalorder %s139, %s142
      %p151 = scmp.eq.s32.totalorder %s24, 1
      %p152 = por %p150, %p151
      %p153 = scmp.ne.s32.totalorder %s142, %s143
      %p154 = scmp.eq.s32.totalorder %s24, 0
      %p155 = por %p153, %p154
      %p156 = scmp.ne.s32.totalorder %s142, %s143
      %p157 = scmp.eq.s32.totalorder %s25, 1
      %p158 = por %p156, %p157
      %p160 = scmp.ne.s32.totalorder %s143, %s159
      %p161 = scmp.eq.s32.totalorder %s25, 0
      %p162 = por %p160, %p161
      %s163 = ssub.s32 %s19, %s26
      %p164 = scmp.eq.s32.totalorder %s163, 0
      %s166 = sadd.s32 %s165, 1
      %s167 = scalar_select %p164, %s165, %s166
      %p170 = pneg %p164
      %p171 = scmp.eq.s32.totalorder %s19, 1
      %p172 = por %p170, %p171
      %p173 = scmp.ne.s32.totalorder %s165, %s168
      %p174 = scmp.eq.s32.totalorder %s19, 0
      %p175 = por %p173, %p174
      %p176 = scmp.ne.s32.totalorder %s165, %s168
      %p177 = scmp.eq.s32.totalorder %s24, 1
      %p178 = por %p176, %p177
      %p179 = scmp.ne.s32.totalorder %s168, %s169
      %p180 = scmp.eq.s32.totalorder %s24, 0
      %p181 = por %p179, %p180
      %p182 = scmp.ne.s32.totalorder %s168, %s169
      %p183 = scmp.eq.s32.totalorder %s25, 1
      %p184 = por %p182, %p183
      %p186 = scmp.ne.s32.totalorder %s169, %s185
      %p187 = scmp.eq.s32.totalorder %s25, 0
      %p188 = por %p186, %p187
      %p189 = scmp.le.s32.totalorder 1, %s19
      %p190 = scmp.lt.s32.totalorder %s19, 3
      %p191 = pnand %p189, %p190
      %p192 = pneg %p191
      // Predicated region
      $region9: #{tpu_custom_call.1} parent=5 // pred_check
        _
      $region10: #{tpu_custom_call.1} parent=5 // pred_check_branch
        %194 = sbr.rel (%p191) target = $region12
      $region11: #{tpu_custom_call.1} parent=5 // pred_region
        %s195 = ssub.s32 %s19, 1
        // Predicated region
        $region13: #{tpu_custom_call.1} parent=11 // pred_check
          %p196 = pneg %p66
        $region14: #{tpu_custom_call.1} parent=11 // pred_check_branch
          %198 = sbr.rel (%p196) target = $region16
        $region15: #{tpu_custom_call.1} parent=11 // pred_region
          _
        $region16: #{tpu_custom_call.1} parent=11 // pred_fallthru
          _
        // Predicated region
        $region17: #{tpu_custom_call.1} parent=11 // pred_check
          %p199 = pneg %p87
        $region18: #{tpu_custom_call.1} parent=11 // pred_check_branch
          %201 = sbr.rel (%p199) target = $region20
        $region19: #{tpu_custom_call.1} parent=11 // pred_region
          _
        $region20: #{tpu_custom_call.1} parent=11 // pred_fallthru
          _
        // Predicated region
        $region21: #{tpu_custom_call.1} parent=11 // pred_check
          %p202 = pneg %p108
        $region22: #{tpu_custom_call.1} parent=11 // pred_check_branch
          %204 = sbr.rel (%p202) target = $region24
        $region23: #{tpu_custom_call.1} parent=11 // pred_region
          _
        $region24: #{tpu_custom_call.1} parent=11 // pred_fallthru
          _
        // Predicated region
        $region25: #{tpu_custom_call.1} parent=11 // pred_check
          %p205 = pneg %p129
        $region26: #{tpu_custom_call.1} parent=11 // pred_check_branch
          %207 = sbr.rel (%p205) target = $region28
        $region27: #{tpu_custom_call.1} parent=11 // pred_region
          _
        $region28: #{tpu_custom_call.1} parent=11 // pred_fallthru
          _
      $region12: #{tpu_custom_call.1} parent=5 // pred_fallthru
        _
      %p208 = scmp.lt.s32.totalorder %s19, 2
      // Predicated region
      $region29: #{tpu_custom_call.1} parent=5 // pred_check
        %p209 = pneg %p208
      $region30: #{tpu_custom_call.1} parent=5 // pred_check_branch
        %211 = sbr.rel (%p209) target = $region32
      $region31: #{tpu_custom_call.1} parent=5 // pred_region
        // Predicated region
        $region33: #{tpu_custom_call.1} parent=31 // pred_check
          %p212 = pneg %p39
        $region34: #{tpu_custom_call.1} parent=31 // pred_check_branch
          %214 = sbr.rel (%p212) target = $region36
        $region35: #{tpu_custom_call.1} parent=31 // pred_region
          %p215 = scmp.lt.s32.totalorder %s19, 1
          %s216 = scalar_select %p215, %s19, 1
          %s217 = smul.addr %s216, 2
          %s218 = smul.addr %s217, 4
          %s219 = scalar_lea.vmem %s0, %s218
        $region36: #{tpu_custom_call.1} parent=31 // pred_fallthru
          _
      $region32: #{tpu_custom_call.1} parent=5 // pred_fallthru
        _
      %p220 = scmp.le.s32.totalorder 1, %s19
      %p221 = scmp.lt.s32.totalorder %s19, 3
      %p222 = pnand %p220, %p221
      %p223 = pneg %p222
      // Predicated region
      $region37: #{tpu_custom_call.1} parent=5 // pred_check
        _
      $region38: #{tpu_custom_call.1} parent=5 // pred_check_branch
        %225 = sbr.rel (%p222) target = $region40
      $region39: #{tpu_custom_call.1} parent=5 // pred_region
        %s226 = ssub.s32 %s19, 1
        %p227 = scmp.lt.s32.totalorder %s24, 1
        %s228 = scalar_select %p227, %s24, 1
        %s229 = smul.addr %s228, 2
        %s230 = smul.addr %s229, 4
        %s231 = scalar_lea.vmem %s0, %s230
        %p232 = pneg %p45
        %p233 = pneg %p42
        %p234 = pneg %p66
        %p235 = pneg %p63
        %p236 = pneg %p87
        %p237 = pneg %p84
        %p238 = pneg %p108
        %p239 = pneg %p105
        %p240 = pneg %p129
        %p241 = pneg %p126
        %p242 = pneg %p155
        %p243 = pneg %p152
        %s244 = sand.u32 %s142, 1
        %s245 = scalar_lea.sflag [#allocation3], %s244
        %s246 = sand.u32 %s142, 1
        %s247 = smul.addr %s246, 8
        %s248 = scalar_lea.vmem [#allocation2], %s247
        %p249 = pneg %p181
        %p250 = pneg %p178
        %s251 = sand.u32 %s168, 1
        %s252 = scalar_lea.sflag [#allocation5], %s251
        %s253 = sand.u32 %s168, 1
        %s254 = smul.addr %s253, 8
        %s255 = scalar_lea.vmem [#allocation4], %s254
        %p256 = scmp.lt.s32.totalorder %s24, 1
        %s257 = scalar_select %p256, %s24, 1
        %s258 = smul.addr %s257, 2
        %s259 = smul.addr %s258, 4
        %s260 = scalar_lea.vmem %s0, %s259
        %v261 = vld [vmem:[%s260] sm:$0xff]
        %v262 = vld [vmem:[%s1] sm:$0xf]
        %v264 = vcombine.high %v261, %v261
        %266 = vrot.lane.b32.xlu0 %v261, 17
        %v267 = vpop.permute.xlu0 %266
        %268 = vrot.lane.b32.xlu0 %v264, 17
        %v269 = vpop.permute.xlu0 %268
        %v270 = vlaneseq
        %v271 = vand.u32 %v270, 127
        %vm272 = vcmp.lt.s32.totalorder %v271, 17
        %v273 = vsel %vm272, %v267, %v269
        %v274 = vsel %vm272, %v269, %v267
        %v275 = vld [vmem:[%s4] sm:$0x3]
        %v277 = vlaneseq
        %v278 = vshrl.u32 %v277, 7
        %v279 = vsub.s32 0, %v278
        %v280 = vrot.slane %v275, %v279
        %v281 = vlaneseq
        %v282 = vshrl.u32 %v281, 7
        %v283 = vsub.s32 1, %v282
        %v284 = vrot.slane %v275, %v283
        %v287 = vmul.f32 %v274, %v280
        %v288 = vmul.f32 %v273, %v284
        %s289 = scalar_lea.vmem %s1, 4
        %v290 = vld [vmem:[%s289] sm:$0xf]
        %291 = vrot.lane.b32.xlu0 %v261, 16
        %v292 = vpop.permute.xlu0 %291
        %293 = vrot.lane.b32.xlu0 %v264, 16
        %v294 = vpop.permute.xlu0 %293
        %vm295 = vcmp.lt.s32.totalorder %v271, 16
        %v296 = vsel %vm295, %v292, %v294
        %v297 = vsel %vm295, %v294, %v292
        %s298 = scalar_lea.vmem %s4, 2
        %v299 = vld [vmem:[%s298] sm:$0x3]
        %v301 = vlaneseq
        %v302 = vshrl.u32 %v301, 7
        %v303 = vsub.s32 0, %v302
        %v304 = vrot.slane %v299, %v303
        %v305 = vlaneseq
        %v306 = vshrl.u32 %v305, 7
        %v307 = vsub.s32 1, %v306
        %v308 = vrot.slane %v299, %v307
        %v311 = vmul.f32 %v297, %v304
        %v312 = vmul.f32 %v296, %v308
        %vm313 = vcmask 31744
        %v315 = vsel %vm313, %v290, 0
        %vm317 = vcmask 1043456
        %v319 = vsel %vm317, %v311, 0
        %v322 = vsel %vm317, %v312, 0
        %324 = vmatprep.subr.mxu0 %v322
        %325 = vmatpush1.msra.mxu0 %v319
        %326 = vmatprep.subr.mxu0 0.0
        %327 = vmatpush1.msra.mxu0 0.0
        %328 = vmatprep.subr.mxu0 0.0
        %329 = vmatpush1.msra.mxu0 0.0
        %330 = vmatprep.subr.mxu0 0.0
        %331 = vmatpush1.msra.mxu0 0.0
        %332 = vmatprep.subr.mxu0 0.0
        %333 = vmatpush1.msra.mxu0 0.0
        %334 = vmatprep.subr.mxu0 0.0
        %335 = vmatpush1.msra.mxu0 0.0
        %336 = vmatprep.subr.mxu0 0.0
        %337 = vmatpush1.msra.mxu0 0.0
        %338 = vmatprep.subr.mxu0 0.0
        %339 = vmatpush1.msra.mxu0 0.0
        %340 = vmatprep.subr.mxu0 0.0
        %341 = vmatpush1.msra.mxu0 0.0
        %342 = vmatprep.subr.mxu0 0.0
        %343 = vmatpush1.msra.mxu0 0.0
        %344 = vmatprep.subr.mxu0 0.0
        %345 = vmatpush1.msra.mxu0 0.0
        %346 = vmatprep.subr.mxu0 0.0
        %347 = vmatpush1.msra.mxu0 0.0
        %348 = vmatprep.subr.mxu0 0.0
        %349 = vmatpush1.msra.mxu0 0.0
        %350 = vmatprep.subr.mxu0 0.0
        %351 = vmatpush1.msra.mxu0 0.0
        %352 = vmatprep.subr.mxu0 0.0
        %353 = vmatpush1.msra.mxu0 0.0
        %354 = vmatprep.subr.mxu0 0.0
        %355 = vmatpush1.msra.mxu0 0.0
        %356 = vmatprep.subr.mxu0 0.0
        %357 = vmatpush1.msra.mxu0 0.0
        %358 = vmatprep.subr.mxu0 0.0
        %359 = vmatpush1.msra.mxu0 0.0
        %360 = vmatprep.subr.mxu0 0.0
        %361 = vmatpush1.msra.mxu0 0.0
        %362 = vmatprep.subr.mxu0 0.0
        %363 = vmatpush1.msra.mxu0 0.0
        %364 = vmatprep.subr.mxu0 0.0
        %365 = vmatpush1.msra.mxu0 0.0
        %366 = vmatprep.subr.mxu0 0.0
        %367 = vmatpush1.msra.mxu0 0.0
        %368 = vmatprep.subr.mxu0 0.0
        %369 = vmatpush1.msra.mxu0 0.0
        %370 = vmatprep.subr.mxu0 0.0
        %371 = vmatpush1.msra.mxu0 0.0
        %372 = vmatprep.subr.mxu0 0.0
        %373 = vmatpush1.msra.mxu0 0.0
        %374 = vmatprep.subr.mxu0 0.0
        %375 = vmatpush1.msra.mxu0 0.0
        %376 = vmatprep.subr.mxu0 0.0
        %377 = vmatpush1.msra.mxu0 0.0
        %378 = vmatprep.subr.mxu0 0.0
        %379 = vmatpush1.msra.mxu0 0.0
        %380 = vmatprep.subr.mxu0 0.0
        %381 = vmatpush1.msra.mxu0 0.0
        %382 = vmatprep.subr.mxu0 0.0
        %383 = vmatpush1.msra.mxu0 0.0
        %384 = vmatprep.subr.mxu0 0.0
        %385 = vmatpush1.msra.mxu0 0.0
        %386 = vmatprep.subr.mxu0 0.0
        %387 = vmatpush1.msra.mxu0 0.0
        %388 = vmatprep.mubr.f32.mxu0 0.0
        %389 = vmatmul.mubr.f32.gmra.mrb[0].mxu0 %v315
        %v390 = vpop.f32.mrb[0].mxu0
        %v391 = vadd.f32 0.0, %v390
        %v392 = vpop.f32.mrb[0].mxu0
        %v393 = vadd.f32 0.0, %v392
        %394 = vdwg.mxu0
        %v396 = vsel %vm313, %v262, 0
        %v399 = vsel %vm317, %v287, 0
        %v402 = vsel %vm317, %v288, 0
        %404 = vmatprep.subr.mxu0 %v402
        %405 = vmatpush1.msra.mxu0 %v399
        %406 = vmatprep.subr.mxu0 0.0
        %407 = vmatpush1.msra.mxu0 0.0
        %408 = vmatprep.subr.mxu0 0.0
        %409 = vmatpush1.msra.mxu0 0.0
        %410 = vmatprep.subr.mxu0 0.0
        %411 = vmatpush1.msra.mxu0 0.0
        %412 = vmatprep.subr.mxu0 0.0
        %413 = vmatpush1.msra.mxu0 0.0
        %414 = vmatprep.subr.mxu0 0.0
        %415 = vmatpush1.msra.mxu0 0.0
        %416 = vmatprep.subr.mxu0 0.0
        %417 = vmatpush1.msra.mxu0 0.0
        %418 = vmatprep.subr.mxu0 0.0
        %419 = vmatpush1.msra.mxu0 0.0
        %420 = vmatprep.subr.mxu0 0.0
        %421 = vmatpush1.msra.mxu0 0.0
        %422 = vmatprep.subr.mxu0 0.0
        %423 = vmatpush1.msra.mxu0 0.0
        %424 = vmatprep.subr.mxu0 0.0
        %425 = vmatpush1.msra.mxu0 0.0
        %426 = vmatprep.subr.mxu0 0.0
        %427 = vmatpush1.msra.mxu0 0.0
        %428 = vmatprep.subr.mxu0 0.0
        %429 = vmatpush1.msra.mxu0 0.0
        %430 = vmatprep.subr.mxu0 0.0
        %431 = vmatpush1.msra.mxu0 0.0
        %432 = vmatprep.subr.mxu0 0.0
        %433 = vmatpush1.msra.mxu0 0.0
        %434 = vmatprep.subr.mxu0 0.0
        %435 = vmatpush1.msra.mxu0 0.0
        %436 = vmatprep.subr.mxu0 0.0
        %437 = vmatpush1.msra.mxu0 0.0
        %438 = vmatprep.subr.mxu0 0.0
        %439 = vmatpush1.msra.mxu0 0.0
        %440 = vmatprep.subr.mxu0 0.0
        %441 = vmatpush1.msra.mxu0 0.0
        %442 = vmatprep.subr.mxu0 0.0
        %443 = vmatpush1.msra.mxu0 0.0
        %444 = vmatprep.subr.mxu0 0.0
        %445 = vmatpush1.msra.mxu0 0.0
        %446 = vmatprep.subr.mxu0 0.0
        %447 = vmatpush1.msra.mxu0 0.0
        %448 = vmatprep.subr.mxu0 0.0
        %449 = vmatpush1.msra.mxu0 0.0
        %450 = vmatprep.subr.mxu0 0.0
        %451 = vmatpush1.msra.mxu0 0.0
        %452 = vmatprep.subr.mxu0 0.0
        %453 = vmatpush1.msra.mxu0 0.0
        %454 = vmatprep.subr.mxu0 0.0
        %455 = vmatpush1.msra.mxu0 0.0
        %456 = vmatprep.subr.mxu0 0.0
        %457 = vmatpush1.msra.mxu0 0.0
        %458 = vmatprep.subr.mxu0 0.0
        %459 = vmatpush1.msra.mxu0 0.0
        %460 = vmatprep.subr.mxu0 0.0
        %461 = vmatpush1.msra.mxu0 0.0
        %462 = vmatprep.subr.mxu0 0.0
        %463 = vmatpush1.msra.mxu0 0.0
        %464 = vmatprep.subr.mxu0 0.0
        %465 = vmatpush1.msra.mxu0 0.0
        %466 = vmatprep.subr.mxu0 0.0
        %467 = vmatpush1.msra.mxu0 0.0
        %468 = vmatprep.mubr.f32.mxu0 0.0
        %469 = vmatmul.mubr.f32.gmra.mrb[0].mxu0 %v396
        %v470 = vpop.f32.mrb[0].mxu0
        %v471 = vadd.f32 %v391, %v470
        %v472 = vpop.f32.mrb[0].mxu0
        %v473 = vadd.f32 %v393, %v472
        %474 = vdwg.mxu0
        %s475 = scalar_lea.vmem %s1, 8
        %v476 = vld [vmem:[%s475] sm:$0xf]
        %477 = vrot.lane.b32.xlu0 %v261, 15
        %v478 = vpop.permute.xlu0 %477
        %479 = vrot.lane.b32.xlu0 %v264, 15
        %v480 = vpop.permute.xlu0 %479
        %vm481 = vcmp.lt.s32.totalorder %v271, 15
        %v482 = vsel %vm481, %v478, %v480
        %v483 = vsel %vm481, %v480, %v478
        %s484 = scalar_lea.vmem %s4, 4
        %v485 = vld [vmem:[%s484] sm:$0x3]
        %v487 = vlaneseq
        %v488 = vshrl.u32 %v487, 7
        %v489 = vsub.s32 0, %v488
        %v490 = vrot.slane %v485, %v489
        %v491 = vlaneseq
        %v492 = vshrl.u32 %v491, 7
        %v493 = vsub.s32 1, %v492
        %v494 = vrot.slane %v485, %v493
        %v497 = vmul.f32 %v483, %v490
        %v498 = vmul.f32 %v482, %v494
        %v500 = vsel %vm313, %v476, 0
        %v503 = vsel %vm317, %v497, 0
        %v506 = vsel %vm317, %v498, 0
        %508 = vmatprep.subr.mxu0 %v506
        %509 = vmatpush1.msra.mxu0 %v503
        %510 = vmatprep.subr.mxu0 0.0
        %511 = vmatpush1.msra.mxu0 0.0
        %512 = vmatprep.subr.mxu0 0.0
        %513 = vmatpush1.msra.mxu0 0.0
        %514 = vmatprep.subr.mxu0 0.0
        %515 = vmatpush1.msra.mxu0 0.0
        %516 = vmatprep.subr.mxu0 0.0
        %517 = vmatpush1.msra.mxu0 0.0
        %518 = vmatprep.subr.mxu0 0.0
        %519 = vmatpush1.msra.mxu0 0.0
        %520 = vmatprep.subr.mxu0 0.0
        %521 = vmatpush1.msra.mxu0 0.0
        %522 = vmatprep.subr.mxu0 0.0
        %523 = vmatpush1.msra.mxu0 0.0
        %524 = vmatprep.subr.mxu0 0.0
        %525 = vmatpush1.msra.mxu0 0.0
        %526 = vmatprep.subr.mxu0 0.0
        %527 = vmatpush1.msra.mxu0 0.0
        %528 = vmatprep.subr.mxu0 0.0
        %529 = vmatpush1.msra.mxu0 0.0
        %530 = vmatprep.subr.mxu0 0.0
        %531 = vmatpush1.msra.mxu0 0.0
        %532 = vmatprep.subr.mxu0 0.0
        %533 = vmatpush1.msra.mxu0 0.0
        %534 = vmatprep.subr.mxu0 0.0
        %535 = vmatpush1.msra.mxu0 0.0
        %536 = vmatprep.subr.mxu0 0.0
        %537 = vmatpush1.msra.mxu0 0.0
        %538 = vmatprep.subr.mxu0 0.0
        %539 = vmatpush1.msra.mxu0 0.0
        %540 = vmatprep.subr.mxu0 0.0
        %541 = vmatpush1.msra.mxu0 0.0
        %542 = vmatprep.subr.mxu0 0.0
        %543 = vmatpush1.msra.mxu0 0.0
        %544 = vmatprep.subr.mxu0 0.0
        %545 = vmatpush1.msra.mxu0 0.0
        %546 = vmatprep.subr.mxu0 0.0
        %547 = vmatpush1.msra.mxu0 0.0
        %548 = vmatprep.subr.mxu0 0.0
        %549 = vmatpush1.msra.mxu0 0.0
        %550 = vmatprep.subr.mxu0 0.0
        %551 = vmatpush1.msra.mxu0 0.0
        %552 = vmatprep.subr.mxu0 0.0
        %553 = vmatpush1.msra.mxu0 0.0
        %554 = vmatprep.subr.mxu0 0.0
        %555 = vmatpush1.msra.mxu0 0.0
        %556 = vmatprep.subr.mxu0 0.0
        %557 = vmatpush1.msra.mxu0 0.0
        %558 = vmatprep.subr.mxu0 0.0
        %559 = vmatpush1.msra.mxu0 0.0
        %560 = vmatprep.subr.mxu0 0.0
        %561 = vmatpush1.msra.mxu0 0.0
        %562 = vmatprep.subr.mxu0 0.0
        %563 = vmatpush1.msra.mxu0 0.0
        %564 = vmatprep.subr.mxu0 0.0
        %565 = vmatpush1.msra.mxu0 0.0
        %566 = vmatprep.subr.mxu0 0.0
        %567 = vmatpush1.msra.mxu0 0.0
        %568 = vmatprep.subr.mxu0 0.0
        %569 = vmatpush1.msra.mxu0 0.0
        %570 = vmatprep.subr.mxu0 0.0
        %571 = vmatpush1.msra.mxu0 0.0
        %572 = vmatprep.mubr.f32.mxu0 0.0
        %573 = vmatmul.mubr.f32.gmra.mrb[0].mxu0 %v500
        %v574 = vpop.f32.mrb[0].mxu0
        %v575 = vadd.f32 0.0, %v574
        %v576 = vpop.f32.mrb[0].mxu0
        %v577 = vadd.f32 0.0, %v576
        %578 = vdwg.mxu0
        %v579 = vadd.f32 %v471, %v575
        %v580 = vadd.f32 %v473, %v577
        %s581 = scalar_lea.vmem %s1, 12
        %v582 = vld [vmem:[%s581] sm:$0xf]
        %583 = vrot.lane.b32.xlu0 %v261, 1
        %v584 = vpop.permute.xlu0 %583
        %585 = vrot.lane.b32.xlu0 %v264, 1
        %v586 = vpop.permute.xlu0 %585
        %vm587 = vcmp.lt.s32.totalorder %v271, 1
        %v588 = vsel %vm587, %v584, %v586
        %v589 = vsel %vm587, %v586, %v584
        %s590 = scalar_lea.vmem %s4, 6
        %v591 = vld [vmem:[%s590] sm:$0x3]
        %v593 = vlaneseq
        %v594 = vshrl.u32 %v593, 7
        %v595 = vsub.s32 0, %v594
        %v596 = vrot.slane %v591, %v595
        %v597 = vlaneseq
        %v598 = vshrl.u32 %v597, 7
        %v599 = vsub.s32 1, %v598
        %v600 = vrot.slane %v591, %v599
        %v603 = vmul.f32 %v589, %v596
        %v604 = vmul.f32 %v588, %v600
        %v606 = vsel %vm313, %v582, 0
        %v609 = vsel %vm317, %v603, 0
        %v612 = vsel %vm317, %v604, 0
        %614 = vmatprep.subr.mxu0 %v612
        %615 = vmatpush1.msra.mxu0 %v609
        %616 = vmatprep.subr.mxu0 0.0
        %617 = vmatpush1.msra.mxu0 0.0
        %618 = vmatprep.subr.mxu0 0.0
        %619 = vmatpush1.msra.mxu0 0.0
        %620 = vmatprep.subr.mxu0 0.0
        %621 = vmatpush1.msra.mxu0 0.0
        %622 = vmatprep.subr.mxu0 0.0
        %623 = vmatpush1.msra.mxu0 0.0
        %624 = vmatprep.subr.mxu0 0.0
        %625 = vmatpush1.msra.mxu0 0.0
        %626 = vmatprep.subr.mxu0 0.0
        %627 = vmatpush1.msra.mxu0 0.0
        %628 = vmatprep.subr.mxu0 0.0
        %629 = vmatpush1.msra.mxu0 0.0
        %630 = vmatprep.subr.mxu0 0.0
        %631 = vmatpush1.msra.mxu0 0.0
        %632 = vmatprep.subr.mxu0 0.0
        %633 = vmatpush1.msra.mxu0 0.0
        %634 = vmatprep.subr.mxu0 0.0
        %635 = vmatpush1.msra.mxu0 0.0
        %636 = vmatprep.subr.mxu0 0.0
        %637 = vmatpush1.msra.mxu0 0.0
        %638 = vmatprep.subr.mxu0 0.0
        %639 = vmatpush1.msra.mxu0 0.0
        %640 = vmatprep.subr.mxu0 0.0
        %641 = vmatpush1.msra.mxu0 0.0
        %642 = vmatprep.subr.mxu0 0.0
        %643 = vmatpush1.msra.mxu0 0.0
        %644 = vmatprep.subr.mxu0 0.0
        %645 = vmatpush1.msra.mxu0 0.0
        %646 = vmatprep.subr.mxu0 0.0
        %647 = vmatpush1.msra.mxu0 0.0
        %648 = vmatprep.subr.mxu0 0.0
        %649 = vmatpush1.msra.mxu0 0.0
        %650 = vmatprep.subr.mxu0 0.0
        %651 = vmatpush1.msra.mxu0 0.0
        %652 = vmatprep.subr.mxu0 0.0
        %653 = vmatpush1.msra.mxu0 0.0
        %654 = vmatprep.subr.mxu0 0.0
        %655 = vmatpush1.msra.mxu0 0.0
        %656 = vmatprep.subr.mxu0 0.0
        %657 = vmatpush1.msra.mxu0 0.0
        %658 = vmatprep.subr.mxu0 0.0
        %659 = vmatpush1.msra.mxu0 0.0
        %660 = vmatprep.subr.mxu0 0.0
        %661 = vmatpush1.msra.mxu0 0.0
        %662 = vmatprep.subr.mxu0 0.0
        %663 = vmatpush1.msra.mxu0 0.0
        %664 = vmatprep.subr.mxu0 0.0
        %665 = vmatpush1.msra.mxu0 0.0
        %666 = vmatprep.subr.mxu0 0.0
        %667 = vmatpush1.msra.mxu0 0.0
        %668 = vmatprep.subr.mxu0 0.0
        %669 = vmatpush1.msra.mxu0 0.0
        %670 = vmatprep.subr.mxu0 0.0
        %671 = vmatpush1.msra.mxu0 0.0
        %672 = vmatprep.subr.mxu0 0.0
        %673 = vmatpush1.msra.mxu0 0.0
        %674 = vmatprep.subr.mxu0 0.0
        %675 = vmatpush1.msra.mxu0 0.0
        %676 = vmatprep.subr.mxu0 0.0
        %677 = vmatpush1.msra.mxu0 0.0
        %678 = vmatprep.mubr.f32.mxu0 0.0
        %679 = vmatmul.mubr.f32.gmra.mrb[0].mxu0 %v606
        %v680 = vpop.f32.mrb[0].mxu0
        %v681 = vadd.f32 0.0, %v680
        %v682 = vpop.f32.mrb[0].mxu0
        %v683 = vadd.f32 0.0, %v682
        %684 = vdwg.mxu0
        %v685 = vadd.f32 %v579, %v681
        %v686 = vadd.f32 %v580, %v683
        %s687 = scalar_lea.vmem %s1, 16
        %v688 = vld [vmem:[%s687] sm:$0xf]
        %v690 = vsel %vm313, %v688, 0
        %v692 = vsel %vm317, %v261, 0
        %v694 = vsel %vm317, %v264, 0
        %696 = vmatprep.subr.mxu0 %v694
        %697 = vmatpush1.msra.mxu0 %v692
        %698 = vmatprep.subr.mxu0 0.0
        %699 = vmatpush1.msra.mxu0 0.0
        %700 = vmatprep.subr.mxu0 0.0
        %701 = vmatpush1.msra.mxu0 0.0
        %702 = vmatprep.subr.mxu0 0.0
        %703 = vmatpush1.msra.mxu0 0.0
        %704 = vmatprep.subr.mxu0 0.0
        %705 = vmatpush1.msra.mxu0 0.0
        %706 = vmatprep.subr.mxu0 0.0
        %707 = vmatpush1.msra.mxu0 0.0
        %708 = vmatprep.subr.mxu0 0.0
        %709 = vmatpush1.msra.mxu0 0.0
        %710 = vmatprep.subr.mxu0 0.0
        %711 = vmatpush1.msra.mxu0 0.0
        %712 = vmatprep.subr.mxu0 0.0
        %713 = vmatpush1.msra.mxu0 0.0
        %714 = vmatprep.subr.mxu0 0.0
        %715 = vmatpush1.msra.mxu0 0.0
        %716 = vmatprep.subr.mxu0 0.0
        %717 = vmatpush1.msra.mxu0 0.0
        %718 = vmatprep.subr.mxu0 0.0
        %719 = vmatpush1.msra.mxu0 0.0
        %720 = vmatprep.subr.mxu0 0.0
        %721 = vmatpush1.msra.mxu0 0.0
        %722 = vmatprep.subr.mxu0 0.0
        %723 = vmatpush1.msra.mxu0 0.0
        %724 = vmatprep.subr.mxu0 0.0
        %725 = vmatpush1.msra.mxu0 0.0
        %726 = vmatprep.subr.mxu0 0.0
        %727 = vmatpush1.msra.mxu0 0.0
        %728 = vmatprep.subr.mxu0 0.0
        %729 = vmatpush1.msra.mxu0 0.0
        %730 = vmatprep.subr.mxu0 0.0
        %731 = vmatpush1.msra.mxu0 0.0
        %732 = vmatprep.subr.mxu0 0.0
        %733 = vmatpush1.msra.mxu0 0.0
        %734 = vmatprep.subr.mxu0 0.0
        %735 = vmatpush1.msra.mxu0 0.0
        %736 = vmatprep.subr.mxu0 0.0
        %737 = vmatpush1.msra.mxu0 0.0
        %738 = vmatprep.subr.mxu0 0.0
        %739 = vmatpush1.msra.mxu0 0.0
        %740 = vmatprep.subr.mxu0 0.0
        %741 = vmatpush1.msra.mxu0 0.0
        %742 = vmatprep.subr.mxu0 0.0
        %743 = vmatpush1.msra.mxu0 0.0
        %744 = vmatprep.subr.mxu0 0.0
        %745 = vmatpush1.msra.mxu0 0.0
        %746 = vmatprep.subr.mxu0 0.0
        %747 = vmatpush1.msra.mxu0 0.0
        %748 = vmatprep.subr.mxu0 0.0
        %749 = vmatpush1.msra.mxu0 0.0
        %750 = vmatprep.subr.mxu0 0.0
        %751 = vmatpush1.msra.mxu0 0.0
        %752 = vmatprep.subr.mxu0 0.0
        %753 = vmatpush1.msra.mxu0 0.0
        %754 = vmatprep.subr.mxu0 0.0
        %755 = vmatpush1.msra.mxu0 0.0
        %756 = vmatprep.subr.mxu0 0.0
        %757 = vmatpush1.msra.mxu0 0.0
        %758 = vmatprep.subr.mxu0 0.0
        %759 = vmatpush1.msra.mxu0 0.0
        %760 = vmatprep.mubr.f32.mxu0 0.0
        %761 = vmatmul.mubr.f32.gmra.mrb[0].mxu0 %v690
        %v762 = vpop.f32.mrb[0].mxu0
        %v763 = vadd.f32 0.0, %v762
        %v764 = vpop.f32.mrb[0].mxu0
        %v765 = vadd.f32 0.0, %v764
        %766 = vdwg.mxu0
        %v767 = vadd.f32 %v685, %v763
        %v768 = vadd.f32 %v686, %v765
        %s769 = scalar_lea.vmem %s1, 20
        %v770 = vld [vmem:[%s769] sm:$0xf]
        %771 = vrot.lane.b32.xlu0 %v261, 127
        %v772 = vpop.permute.xlu0 %771
        %773 = vrot.lane.b32.xlu0 %v264, 127
        %v774 = vpop.permute.xlu0 %773
        %vm775 = vcmp.lt.s32.totalorder %v271, 127
        %v776 = vsel %vm775, %v772, %v774
        %v777 = vsel %vm775, %v774, %v772
        %s778 = scalar_lea.vmem %s4, 10
        %v779 = vld [vmem:[%s778] sm:$0x3]
        %v781 = vlaneseq
        %v782 = vshrl.u32 %v781, 7
        %v783 = vsub.s32 0, %v782
        %v784 = vrot.slane %v779, %v783
        %v785 = vlaneseq
        %v786 = vshrl.u32 %v785, 7
        %v787 = vsub.s32 1, %v786
        %v788 = vrot.slane %v779, %v787
        %v791 = vmul.f32 %v776, %v784
        %v792 = vmul.f32 %v777, %v788
        %v794 = vsel %vm313, %v770, 0
        %v797 = vsel %vm317, %v791, 0
        %v800 = vsel %vm317, %v792, 0
        %802 = vmatprep.subr.mxu0 %v800
        %803 = vmatpush1.msra.mxu0 %v797
        %804 = vmatprep.subr.mxu0 0.0
        %805 = vmatpush1.msra.mxu0 0.0
        %806 = vmatprep.subr.mxu0 0.0
        %807 = vmatpush1.msra.mxu0 0.0
        %808 = vmatprep.subr.mxu0 0.0
        %809 = vmatpush1.msra.mxu0 0.0
        %810 = vmatprep.subr.mxu0 0.0
        %811 = vmatpush1.msra.mxu0 0.0
        %812 = vmatprep.subr.mxu0 0.0
        %813 = vmatpush1.msra.mxu0 0.0
        %814 = vmatprep.subr.mxu0 0.0
        %815 = vmatpush1.msra.mxu0 0.0
        %816 = vmatprep.subr.mxu0 0.0
        %817 = vmatpush1.msra.mxu0 0.0
        %818 = vmatprep.subr.mxu0 0.0
        %819 = vmatpush1.msra.mxu0 0.0
        %820 = vmatprep.subr.mxu0 0.0
        %821 = vmatpush1.msra.mxu0 0.0
        %822 = vmatprep.subr.mxu0 0.0
        %823 = vmatpush1.msra.mxu0 0.0
        %824 = vmatprep.subr.mxu0 0.0
        %825 = vmatpush1.msra.mxu0 0.0
        %826 = vmatprep.subr.mxu0 0.0
        %827 = vmatpush1.msra.mxu0 0.0
        %828 = vmatprep.subr.mxu0 0.0
        %829 = vmatpush1.msra.mxu0 0.0
        %830 = vmatprep.subr.mxu0 0.0
        %831 = vmatpush1.msra.mxu0 0.0
        %832 = vmatprep.subr.mxu0 0.0
        %833 = vmatpush1.msra.mxu0 0.0
        %834 = vmatprep.subr.mxu0 0.0
        %835 = vmatpush1.msra.mxu0 0.0
        %836 = vmatprep.subr.mxu0 0.0
        %837 = vmatpush1.msra.mxu0 0.0
        %838 = vmatprep.subr.mxu0 0.0
        %839 = vmatpush1.msra.mxu0 0.0
        %840 = vmatprep.subr.mxu0 0.0
        %841 = vmatpush1.msra.mxu0 0.0
        %842 = vmatprep.subr.mxu0 0.0
        %843 = vmatpush1.msra.mxu0 0.0
        %844 = vmatprep.subr.mxu0 0.0
        %845 = vmatpush1.msra.mxu0 0.0
        %846 = vmatprep.subr.mxu0 0.0
        %847 = vmatpush1.msra.mxu0 0.0
        %848 = vmatprep.subr.mxu0 0.0
        %849 = vmatpush1.msra.mxu0 0.0
        %850 = vmatprep.subr.mxu0 0.0
        %851 = vmatpush1.msra.mxu0 0.0
        %852 = vmatprep.subr.mxu0 0.0
        %853 = vmatpush1.msra.mxu0 0.0
        %854 = vmatprep.subr.mxu0 0.0
        %855 = vmatpush1.msra.mxu0 0.0
        %856 = vmatprep.subr.mxu0 0.0
        %857 = vmatpush1.msra.mxu0 0.0
        %858 = vmatprep.subr.mxu0 0.0
        %859 = vmatpush1.msra.mxu0 0.0
        %860 = vmatprep.subr.mxu0 0.0
        %861 = vmatpush1.msra.mxu0 0.0
        %862 = vmatprep.subr.mxu0 0.0
        %863 = vmatpush1.msra.mxu0 0.0
        %864 = vmatprep.subr.mxu0 0.0
        %865 = vmatpush1.msra.mxu0 0.0
        %866 = vmatprep.mubr.f32.mxu0 0.0
        %867 = vmatmul.mubr.f32.gmra.mrb[0].mxu0 %v794
        %v868 = vpop.f32.mrb[0].mxu0
        %v869 = vadd.f32 0.0, %v868
        %v870 = vpop.f32.mrb[0].mxu0
        %v871 = vadd.f32 0.0, %v870
        %872 = vdwg.mxu0
        %v873 = vadd.f32 %v767, %v869
        %v874 = vadd.f32 %v768, %v871
        %s875 = scalar_lea.vmem %s1, 24
        %v876 = vld [vmem:[%s875] sm:$0xf]
        %877 = vrot.lane.b32.xlu0 %v261, 113
        %v878 = vpop.permute.xlu0 %877
        %879 = vrot.lane.b32.xlu0 %v264, 113
        %v880 = vpop.permute.xlu0 %879
        %vm881 = vcmp.lt.s32.totalorder %v271, 113
        %v882 = vsel %vm881, %v878, %v880
        %v883 = vsel %vm881, %v880, %v878
        %s884 = scalar_lea.vmem %s4, 12
        %v885 = vld [vmem:[%s884] sm:$0x3]
        %v887 = vlaneseq
        %v888 = vshrl.u32 %v887, 7
        %v889 = vsub.s32 0, %v888
        %v890 = vrot.slane %v885, %v889
        %v891 = vlaneseq
        %v892 = vshrl.u32 %v891, 7
        %v893 = vsub.s32 1, %v892
        %v894 = vrot.slane %v885, %v893
        %v897 = vmul.f32 %v882, %v890
        %v898 = vmul.f32 %v883, %v894
        %v900 = vsel %vm313, %v876, 0
        %v903 = vsel %vm317, %v897, 0
        %v906 = vsel %vm317, %v898, 0
        %908 = vmatprep.subr.mxu0 %v906
        %909 = vmatpush1.msra.mxu0 %v903
        %910 = vmatprep.subr.mxu0 0.0
        %911 = vmatpush1.msra.mxu0 0.0
        %912 = vmatprep.subr.mxu0 0.0
        %913 = vmatpush1.msra.mxu0 0.0
        %914 = vmatprep.subr.mxu0 0.0
        %915 = vmatpush1.msra.mxu0 0.0
        %916 = vmatprep.subr.mxu0 0.0
        %917 = vmatpush1.msra.mxu0 0.0
        %918 = vmatprep.subr.mxu0 0.0
        %919 = vmatpush1.msra.mxu0 0.0
        %920 = vmatprep.subr.mxu0 0.0
        %921 = vmatpush1.msra.mxu0 0.0
        %922 = vmatprep.subr.mxu0 0.0
        %923 = vmatpush1.msra.mxu0 0.0
        %924 = vmatprep.subr.mxu0 0.0
        %925 = vmatpush1.msra.mxu0 0.0
        %926 = vmatprep.subr.mxu0 0.0
        %927 = vmatpush1.msra.mxu0 0.0
        %928 = vmatprep.subr.mxu0 0.0
        %929 = vmatpush1.msra.mxu0 0.0
        %930 = vmatprep.subr.mxu0 0.0
        %931 = vmatpush1.msra.mxu0 0.0
        %932 = vmatprep.subr.mxu0 0.0
        %933 = vmatpush1.msra.mxu0 0.0
        %934 = vmatprep.subr.mxu0 0.0
        %935 = vmatpush1.msra.mxu0 0.0
        %936 = vmatprep.subr.mxu0 0.0
        %937 = vmatpush1.msra.mxu0 0.0
        %938 = vmatprep.subr.mxu0 0.0
        %939 = vmatpush1.msra.mxu0 0.0
        %940 = vmatprep.subr.mxu0 0.0
        %941 = vmatpush1.msra.mxu0 0.0
        %942 = vmatprep.subr.mxu0 0.0
        %943 = vmatpush1.msra.mxu0 0.0
        %944 = vmatprep.subr.mxu0 0.0
        %945 = vmatpush1.msra.mxu0 0.0
        %946 = vmatprep.subr.mxu0 0.0
        %947 = vmatpush1.msra.mxu0 0.0
        %948 = vmatprep.subr.mxu0 0.0
        %949 = vmatpush1.msra.mxu0 0.0
        %950 = vmatprep.subr.mxu0 0.0
        %951 = vmatpush1.msra.mxu0 0.0
        %952 = vmatprep.subr.mxu0 0.0
        %953 = vmatpush1.msra.mxu0 0.0
        %954 = vmatprep.subr.mxu0 0.0
        %955 = vmatpush1.msra.mxu0 0.0
        %956 = vmatprep.subr.mxu0 0.0
        %957 = vmatpush1.msra.mxu0 0.0
        %958 = vmatprep.subr.mxu0 0.0
        %959 = vmatpush1.msra.mxu0 0.0
        %960 = vmatprep.subr.mxu0 0.0
        %961 = vmatpush1.msra.mxu0 0.0
        %962 = vmatprep.subr.mxu0 0.0
        %963 = vmatpush1.msra.mxu0 0.0
        %964 = vmatprep.subr.mxu0 0.0
        %965 = vmatpush1.msra.mxu0 0.0
        %966 = vmatprep.subr.mxu0 0.0
        %967 = vmatpush1.msra.mxu0 0.0
        %968 = vmatprep.subr.mxu0 0.0
        %969 = vmatpush1.msra.mxu0 0.0
        %970 = vmatprep.subr.mxu0 0.0
        %971 = vmatpush1.msra.mxu0 0.0
        %972 = vmatprep.mubr.f32.mxu0 0.0
        %973 = vmatmul.mubr.f32.gmra.mrb[0].mxu0 %v900
        %v974 = vpop.f32.mrb[0].mxu0
        %v975 = vadd.f32 0.0, %v974
        %v976 = vpop.f32.mrb[0].mxu0
        %v977 = vadd.f32 0.0, %v976
        %978 = vdwg.mxu0
        %v979 = vadd.f32 %v873, %v975
        %v980 = vadd.f32 %v874, %v977
        %s981 = scalar_lea.vmem %s1, 28
        %v982 = vld [vmem:[%s981] sm:$0xf]
        %983 = vrot.lane.b32.xlu0 %v261, 112
        %v984 = vpop.permute.xlu0 %983
        %985 = vrot.lane.b32.xlu0 %v264, 112
        %v986 = vpop.permute.xlu0 %985
        %vm987 = vcmp.lt.s32.totalorder %v271, 112
        %v988 = vsel %vm987, %v984, %v986
        %v989 = vsel %vm987, %v986, %v984
        %s990 = scalar_lea.vmem %s4, 14
        %v991 = vld [vmem:[%s990] sm:$0x3]
        %v993 = vlaneseq
        %v994 = vshrl.u32 %v993, 7
        %v995 = vsub.s32 0, %v994
        %v996 = vrot.slane %v991, %v995
        %v997 = vlaneseq
        %v998 = vshrl.u32 %v997, 7
        %v999 = vsub.s32 1, %v998
        %v1000 = vrot.slane %v991, %v999
        %v1003 = vmul.f32 %v988, %v996
        %v1004 = vmul.f32 %v989, %v1000
        %v1006 = vsel %vm313, %v982, 0
        %v1009 = vsel %vm317, %v1003, 0
        %v1012 = vsel %vm317, %v1004, 0
        %1014 = vmatprep.subr.mxu0 %v1012
        %1015 = vmatpush1.msra.mxu0 %v1009
        %1016 = vmatprep.subr.mxu0 0.0
        %1017 = vmatpush1.msra.mxu0 0.0
        %1018 = vmatprep.subr.mxu0 0.0
        %1019 = vmatpush1.msra.mxu0 0.0
        %1020 = vmatprep.subr.mxu0 0.0
        %1021 = vmatpush1.msra.mxu0 0.0
        %1022 = vmatprep.subr.mxu0 0.0
        %1023 = vmatpush1.msra.mxu0 0.0
        %1024 = vmatprep.subr.mxu0 0.0
        %1025 = vmatpush1.msra.mxu0 0.0
        %1026 = vmatprep.subr.mxu0 0.0
        %1027 = vmatpush1.msra.mxu0 0.0
        %1028 = vmatprep.subr.mxu0 0.0
        %1029 = vmatpush1.msra.mxu0 0.0
        %1030 = vmatprep.subr.mxu0 0.0
        %1031 = vmatpush1.msra.mxu0 0.0
        %1032 = vmatprep.subr.mxu0 0.0
        %1033 = vmatpush1.msra.mxu0 0.0
        %1034 = vmatprep.subr.mxu0 0.0
        %1035 = vmatpush1.msra.mxu0 0.0
        %1036 = vmatprep.subr.mxu0 0.0
        %1037 = vmatpush1.msra.mxu0 0.0
        %1038 = vmatprep.subr.mxu0 0.0
        %1039 = vmatpush1.msra.mxu0 0.0
        %1040 = vmatprep.subr.mxu0 0.0
        %1041 = vmatpush1.msra.mxu0 0.0
        %1042 = vmatprep.subr.mxu0 0.0
        %1043 = vmatpush1.msra.mxu0 0.0
        %1044 = vmatprep.subr.mxu0 0.0
        %1045 = vmatpush1.msra.mxu0 0.0
        %1046 = vmatprep.subr.mxu0 0.0
        %1047 = vmatpush1.msra.mxu0 0.0
        %1048 = vmatprep.subr.mxu0 0.0
        %1049 = vmatpush1.msra.mxu0 0.0
        %1050 = vmatprep.subr.mxu0 0.0
        %1051 = vmatpush1.msra.mxu0 0.0
        %1052 = vmatprep.subr.mxu0 0.0
        %1053 = vmatpush1.msra.mxu0 0.0
        %1054 = vmatprep.subr.mxu0 0.0
        %1055 = vmatpush1.msra.mxu0 0.0
        %1056 = vmatprep.subr.mxu0 0.0
        %1057 = vmatpush1.msra.mxu0 0.0
        %1058 = vmatprep.subr.mxu0 0.0
        %1059 = vmatpush1.msra.mxu0 0.0
        %1060 = vmatprep.subr.mxu0 0.0
        %1061 = vmatpush1.msra.mxu0 0.0
        %1062 = vmatprep.subr.mxu0 0.0
        %1063 = vmatpush1.msra.mxu0 0.0
        %1064 = vmatprep.subr.mxu0 0.0
        %1065 = vmatpush1.msra.mxu0 0.0
        %1066 = vmatprep.subr.mxu0 0.0
        %1067 = vmatpush1.msra.mxu0 0.0
        %1068 = vmatprep.subr.mxu0 0.0
        %1069 = vmatpush1.msra.mxu0 0.0
        %1070 = vmatprep.subr.mxu0 0.0
        %1071 = vmatpush1.msra.mxu0 0.0
        %1072 = vmatprep.subr.mxu0 0.0
        %1073 = vmatpush1.msra.mxu0 0.0
        %1074 = vmatprep.subr.mxu0 0.0
        %1075 = vmatpush1.msra.mxu0 0.0
        %1076 = vmatprep.subr.mxu0 0.0
        %1077 = vmatpush1.msra.mxu0 0.0
        %1078 = vmatprep.mubr.f32.mxu0 0.0
        %1079 = vmatmul.mubr.f32.gmra.mrb[0].mxu0 %v1006
        %v1080 = vpop.f32.mrb[0].mxu0
        %v1081 = vadd.f32 0.0, %v1080
        %v1082 = vpop.f32.mrb[0].mxu0
        %v1083 = vadd.f32 0.0, %v1082
        %1084 = vdwg.mxu0
        %v1085 = vadd.f32 %v979, %v1081
        %v1086 = vadd.f32 %v980, %v1083
        %s1087 = scalar_lea.vmem %s1, 32
        %v1088 = vld [vmem:[%s1087] sm:$0xf]
        %1089 = vrot.lane.b32.xlu0 %v261, 111
        %v1090 = vpop.permute.xlu0 %1089
        %1091 = vrot.lane.b32.xlu0 %v264, 111
        %v1092 = vpop.permute.xlu0 %1091
        %vm1093 = vcmp.lt.s32.totalorder %v271, 111
        %v1094 = vsel %vm1093, %v1090, %v1092
        %v1095 = vsel %vm1093, %v1092, %v1090
        %s1096 = scalar_lea.vmem %s4, 16
        %v1097 = vld [vmem:[%s1096] sm:$0x3]
        %v1099 = vlaneseq
        %v1100 = vshrl.u32 %v1099, 7
        %v1101 = vsub.s32 0, %v1100
        %v1102 = vrot.slane %v1097, %v1101
        %v1103 = vlaneseq
        %v1104 = vshrl.u32 %v1103, 7
        %v1105 = vsub.s32 1, %v1104
        %v1106 = vrot.slane %v1097, %v1105
        %v1109 = vmul.f32 %v1094, %v1102
        %v1110 = vmul.f32 %v1095, %v1106
        %v1112 = vsel %vm313, %v1088, 0
        %v1115 = vsel %vm317, %v1109, 0
        %v1118 = vsel %vm317, %v1110, 0
        %1120 = vmatprep.subr.mxu0 %v1118
        %1121 = vmatpush1.msra.mxu0 %v1115
        %1122 = vmatprep.subr.mxu0 0.0
        %1123 = vmatpush1.msra.mxu0 0.0
        %1124 = vmatprep.subr.mxu0 0.0
        %1125 = vmatpush1.msra.mxu0 0.0
        %1126 = vmatprep.subr.mxu0 0.0
        %1127 = vmatpush1.msra.mxu0 0.0
        %1128 = vmatprep.subr.mxu0 0.0
        %1129 = vmatpush1.msra.mxu0 0.0
        %1130 = vmatprep.subr.mxu0 0.0
        %1131 = vmatpush1.msra.mxu0 0.0
        %1132 = vmatprep.subr.mxu0 0.0
        %1133 = vmatpush1.msra.mxu0 0.0
        %1134 = vmatprep.subr.mxu0 0.0
        %1135 = vmatpush1.msra.mxu0 0.0
        %1136 = vmatprep.subr.mxu0 0.0
        %1137 = vmatpush1.msra.mxu0 0.0
        %1138 = vmatprep.subr.mxu0 0.0
        %1139 = vmatpush1.msra.mxu0 0.0
        %1140 = vmatprep.subr.mxu0 0.0
        %1141 = vmatpush1.msra.mxu0 0.0
        %1142 = vmatprep.subr.mxu0 0.0
        %1143 = vmatpush1.msra.mxu0 0.0
        %1144 = vmatprep.subr.mxu0 0.0
        %1145 = vmatpush1.msra.mxu0 0.0
        %1146 = vmatprep.subr.mxu0 0.0
        %1147 = vmatpush1.msra.mxu0 0.0
        %1148 = vmatprep.subr.mxu0 0.0
        %1149 = vmatpush1.msra.mxu0 0.0
        %1150 = vmatprep.subr.mxu0 0.0
        %1151 = vmatpush1.msra.mxu0 0.0
        %1152 = vmatprep.subr.mxu0 0.0
        %1153 = vmatpush1.msra.mxu0 0.0
        %1154 = vmatprep.subr.mxu0 0.0
        %1155 = vmatpush1.msra.mxu0 0.0
        %1156 = vmatprep.subr.mxu0 0.0
        %1157 = vmatpush1.msra.mxu0 0.0
        %1158 = vmatprep.subr.mxu0 0.0
        %1159 = vmatpush1.msra.mxu0 0.0
        %1160 = vmatprep.subr.mxu0 0.0
        %1161 = vmatpush1.msra.mxu0 0.0
        %1162 = vmatprep.subr.mxu0 0.0
        %1163 = vmatpush1.msra.mxu0 0.0
        %1164 = vmatprep.subr.mxu0 0.0
        %1165 = vmatpush1.msra.mxu0 0.0
        %1166 = vmatprep.subr.mxu0 0.0
        %1167 = vmatpush1.msra.mxu0 0.0
        %1168 = vmatprep.subr.mxu0 0.0
        %1169 = vmatpush1.msra.mxu0 0.0
        %1170 = vmatprep.subr.mxu0 0.0
        %1171 = vmatpush1.msra.mxu0 0.0
        %1172 = vmatprep.subr.mxu0 0.0
        %1173 = vmatpush1.msra.mxu0 0.0
        %1174 = vmatprep.subr.mxu0 0.0
        %1175 = vmatpush1.msra.mxu0 0.0
        %1176 = vmatprep.subr.mxu0 0.0
        %1177 = vmatpush1.msra.mxu0 0.0
        %1178 = vmatprep.subr.mxu0 0.0
        %1179 = vmatpush1.msra.mxu0 0.0
        %1180 = vmatprep.subr.mxu0 0.0
        %1181 = vmatpush1.msra.mxu0 0.0
        %1182 = vmatprep.subr.mxu0 0.0
        %1183 = vmatpush1.msra.mxu0 0.0
        %1184 = vmatprep.mubr.f32.mxu0 0.0
        %1185 = vmatmul.mubr.f32.gmra.mrb[0].mxu0 %v1112
        %v1186 = vpop.f32.mrb[0].mxu0
        %v1187 = vadd.f32 0.0, %v1186
        %v1188 = vpop.f32.mrb[0].mxu0
        %v1189 = vadd.f32 0.0, %v1188
        %1190 = vdwg.mxu0
        %v1191 = vadd.f32 %v1085, %v1187
        %v1192 = vadd.f32 %v1086, %v1189
        %v1193 = vld [vmem:[%s3] sm:$0xf]
        %1195 = vset.pattern.permute.xlu0 0
        %1196 = vperm.xlu0 %1195, %v1193
        %v1197 = vpop.permute.xlu0 %1196
        %v1199 = vmul.f32 %v1191, %v1197
        %v1200 = vmul.f32 %v1192, %v1197
        %1201 = vset.pattern.permute.xlu0 1
        %1202 = vperm.xlu0 %1201, %v1193
        %v1203 = vpop.permute.xlu0 %1202
        %v1205 = vadd.f32 %v1199, %v1203
        %v1206 = vadd.f32 %v1200, %v1203
        %v1207 = vmax.f32 %v1205, 0.0
        %v1208 = vmax.f32 %v1206, 0.0
        %v1209 = vld [vmem:[%s2] sm:$0xf]
        %1210 = vrot.lane.b32.xlu0 %v1207, 17
        %v1211 = vpop.permute.xlu0 %1210
        %1212 = vrot.lane.b32.xlu0 %v1208, 17
        %v1213 = vpop.permute.xlu0 %1212
        %v1214 = vsel %vm272, %v1211, %v1213
        %v1215 = vsel %vm272, %v1213, %v1211
        %v1216 = vmul.f32 %v1215, %v280
        %v1217 = vmul.f32 %v1214, %v284
        %s1218 = scalar_lea.vmem %s2, 4
        %v1219 = vld [vmem:[%s1218] sm:$0xf]
        %1220 = vrot.lane.b32.xlu0 %v1207, 16
        %v1221 = vpop.permute.xlu0 %1220
        %1222 = vrot.lane.b32.xlu0 %v1208, 16
        %v1223 = vpop.permute.xlu0 %1222
        %v1224 = vsel %vm295, %v1221, %v1223
        %v1225 = vsel %vm295, %v1223, %v1221
        %v1226 = vmul.f32 %v1225, %v304
        %v1227 = vmul.f32 %v1224, %v308
        %v1229 = vsel %vm313, %v1219, 0
        %v1232 = vsel %vm317, %v1226, 0
        %v1235 = vsel %vm317, %v1227, 0
        %1237 = vmatprep.subr.mxu0 %v1235
        %1238 = vmatpush1.msra.mxu0 %v1232
        %1239 = vmatprep.subr.mxu0 0.0
        %1240 = vmatpush1.msra.mxu0 0.0
        %1241 = vmatprep.subr.mxu0 0.0
        %1242 = vmatpush1.msra.mxu0 0.0
        %1243 = vmatprep.subr.mxu0 0.0
        %1244 = vmatpush1.msra.mxu0 0.0
        %1245 = vmatprep.subr.mxu0 0.0
        %1246 = vmatpush1.msra.mxu0 0.0
        %1247 = vmatprep.subr.mxu0 0.0
        %1248 = vmatpush1.msra.mxu0 0.0
        %1249 = vmatprep.subr.mxu0 0.0
        %1250 = vmatpush1.msra.mxu0 0.0
        %1251 = vmatprep.subr.mxu0 0.0
        %1252 = vmatpush1.msra.mxu0 0.0
        %1253 = vmatprep.subr.mxu0 0.0
        %1254 = vmatpush1.msra.mxu0 0.0
        %1255 = vmatprep.subr.mxu0 0.0
        %1256 = vmatpush1.msra.mxu0 0.0
        %1257 = vmatprep.subr.mxu0 0.0
        %1258 = vmatpush1.msra.mxu0 0.0
        %1259 = vmatprep.subr.mxu0 0.0
        %1260 = vmatpush1.msra.mxu0 0.0
        %1261 = vmatprep.subr.mxu0 0.0
        %1262 = vmatpush1.msra.mxu0 0.0
        %1263 = vmatprep.subr.mxu0 0.0
        %1264 = vmatpush1.msra.mxu0 0.0
        %1265 = vmatprep.subr.mxu0 0.0
        %1266 = vmatpush1.msra.mxu0 0.0
        %1267 = vmatprep.subr.mxu0 0.0
        %1268 = vmatpush1.msra.mxu0 0.0
        %1269 = vmatprep.subr.mxu0 0.0
        %1270 = vmatpush1.msra.mxu0 0.0
        %1271 = vmatprep.subr.mxu0 0.0
        %1272 = vmatpush1.msra.mxu0 0.0
        %1273 = vmatprep.subr.mxu0 0.0
        %1274 = vmatpush1.msra.mxu0 0.0
        %1275 = vmatprep.subr.mxu0 0.0
        %1276 = vmatpush1.msra.mxu0 0.0
        %1277 = vmatprep.subr.mxu0 0.0
        %1278 = vmatpush1.msra.mxu0 0.0
        %1279 = vmatprep.subr.mxu0 0.0
        %1280 = vmatpush1.msra.mxu0 0.0
        %1281 = vmatprep.subr.mxu0 0.0
        %1282 = vmatpush1.msra.mxu0 0.0
        %1283 = vmatprep.subr.mxu0 0.0
        %1284 = vmatpush1.msra.mxu0 0.0
        %1285 = vmatprep.subr.mxu0 0.0
        %1286 = vmatpush1.msra.mxu0 0.0
        %1287 = vmatprep.subr.mxu0 0.0
        %1288 = vmatpush1.msra.mxu0 0.0
        %1289 = vmatprep.subr.mxu0 0.0
        %1290 = vmatpush1.msra.mxu0 0.0
        %1291 = vmatprep.subr.mxu0 0.0
        %1292 = vmatpush1.msra.mxu0 0.0
        %1293 = vmatprep.subr.mxu0 0.0
        %1294 = vmatpush1.msra.mxu0 0.0
        %1295 = vmatprep.subr.mxu0 0.0
        %1296 = vmatpush1.msra.mxu0 0.0
        %1297 = vmatprep.subr.mxu0 0.0
        %1298 = vmatpush1.msra.mxu0 0.0
        %1299 = vmatprep.subr.mxu0 0.0
        %1300 = vmatpush1.msra.mxu0 0.0
        %1301 = vmatprep.mubr.f32.mxu0 0.0
        %1302 = vmatmul.mubr.f32.gmra.mrb[0].mxu0 %v1229
        %v1303 = vpop.f32.mrb[0].mxu0
        %v1304 = vadd.f32 0.0, %v1303
        %v1305 = vpop.f32.mrb[0].mxu0
        %v1306 = vadd.f32 0.0, %v1305
        %1307 = vdwg.mxu0
        %v1309 = vsel %vm313, %v1209, 0
        %v1312 = vsel %vm317, %v1216, 0
        %v1315 = vsel %vm317, %v1217, 0
        %1317 = vmatprep.subr.mxu0 %v1315
        %1318 = vmatpush1.msra.mxu0 %v1312
        %1319 = vmatprep.subr.mxu0 0.0
        %1320 = vmatpush1.msra.mxu0 0.0
        %1321 = vmatprep.subr.mxu0 0.0
        %1322 = vmatpush1.msra.mxu0 0.0
        %1323 = vmatprep.subr.mxu0 0.0
        %1324 = vmatpush1.msra.mxu0 0.0
        %1325 = vmatprep.subr.mxu0 0.0
        %1326 = vmatpush1.msra.mxu0 0.0
        %1327 = vmatprep.subr.mxu0 0.0
        %1328 = vmatpush1.msra.mxu0 0.0
        %1329 = vmatprep.subr.mxu0 0.0
        %1330 = vmatpush1.msra.mxu0 0.0
        %1331 = vmatprep.subr.mxu0 0.0
        %1332 = vmatpush1.msra.mxu0 0.0
        %1333 = vmatprep.subr.mxu0 0.0
        %1334 = vmatpush1.msra.mxu0 0.0
        %1335 = vmatprep.subr.mxu0 0.0
        %1336 = vmatpush1.msra.mxu0 0.0
        %1337 = vmatprep.subr.mxu0 0.0
        %1338 = vmatpush1.msra.mxu0 0.0
        %1339 = vmatprep.subr.mxu0 0.0
        %1340 = vmatpush1.msra.mxu0 0.0
        %1341 = vmatprep.subr.mxu0 0.0
        %1342 = vmatpush1.msra.mxu0 0.0
        %1343 = vmatprep.subr.mxu0 0.0
        %1344 = vmatpush1.msra.mxu0 0.0
        %1345 = vmatprep.subr.mxu0 0.0
        %1346 = vmatpush1.msra.mxu0 0.0
        %1347 = vmatprep.subr.mxu0 0.0
        %1348 = vmatpush1.msra.mxu0 0.0
        %1349 = vmatprep.subr.mxu0 0.0
        %1350 = vmatpush1.msra.mxu0 0.0
        %1351 = vmatprep.subr.mxu0 0.0
        %1352 = vmatpush1.msra.mxu0 0.0
        %1353 = vmatprep.subr.mxu0 0.0
        %1354 = vmatpush1.msra.mxu0 0.0
        %1355 = vmatprep.subr.mxu0 0.0
        %1356 = vmatpush1.msra.mxu0 0.0
        %1357 = vmatprep.subr.mxu0 0.0
        %1358 = vmatpush1.msra.mxu0 0.0
        %1359 = vmatprep.subr.mxu0 0.0
        %1360 = vmatpush1.msra.mxu0 0.0
        %1361 = vmatprep.subr.mxu0 0.0
        %1362 = vmatpush1.msra.mxu0 0.0
        %1363 = vmatprep.subr.mxu0 0.0
        %1364 = vmatpush1.msra.mxu0 0.0
        %1365 = vmatprep.subr.mxu0 0.0
        %1366 = vmatpush1.msra.mxu0 0.0
        %1367 = vmatprep.subr.mxu0 0.0
        %1368 = vmatpush1.msra.mxu0 0.0
        %1369 = vmatprep.subr.mxu0 0.0
        %1370 = vmatpush1.msra.mxu0 0.0
        %1371 = vmatprep.subr.mxu0 0.0
        %1372 = vmatpush1.msra.mxu0 0.0
        %1373 = vmatprep.subr.mxu0 0.0
        %1374 = vmatpush1.msra.mxu0 0.0
        %1375 = vmatprep.subr.mxu0 0.0
        %1376 = vmatpush1.msra.mxu0 0.0
        %1377 = vmatprep.subr.mxu0 0.0
        %1378 = vmatpush1.msra.mxu0 0.0
        %1379 = vmatprep.subr.mxu0 0.0
        %1380 = vmatpush1.msra.mxu0 0.0
        %1381 = vmatprep.mubr.f32.mxu0 0.0
        %1382 = vmatmul.mubr.f32.gmra.mrb[0].mxu0 %v1309
        %v1383 = vpop.f32.mrb[0].mxu0
        %v1384 = vadd.f32 %v1304, %v1383
        %v1385 = vpop.f32.mrb[0].mxu0
        %v1386 = vadd.f32 %v1306, %v1385
        %1387 = vdwg.mxu0
        %s1388 = scalar_lea.vmem %s2, 8
        %v1389 = vld [vmem:[%s1388] sm:$0xf]
        %1390 = vrot.lane.b32.xlu0 %v1207, 15
        %v1391 = vpop.permute.xlu0 %1390
        %1392 = vrot.lane.b32.xlu0 %v1208, 15
        %v1393 = vpop.permute.xlu0 %1392
        %v1394 = vsel %vm481, %v1391, %v1393
        %v1395 = vsel %vm481, %v1393, %v1391
        %v1396 = vmul.f32 %v1395, %v490
        %v1397 = vmul.f32 %v1394, %v494
        %v1399 = vsel %vm313, %v1389, 0
        %v1402 = vsel %vm317, %v1396, 0
        %v1405 = vsel %vm317, %v1397, 0
        %1407 = vmatprep.subr.mxu0 %v1405
        %1408 = vmatpush1.msra.mxu0 %v1402
        %1409 = vmatprep.subr.mxu0 0.0
        %1410 = vmatpush1.msra.mxu0 0.0
        %1411 = vmatprep.subr.mxu0 0.0
        %1412 = vmatpush1.msra.mxu0 0.0
        %1413 = vmatprep.subr.mxu0 0.0
        %1414 = vmatpush1.msra.mxu0 0.0
        %1415 = vmatprep.subr.mxu0 0.0
        %1416 = vmatpush1.msra.mxu0 0.0
        %1417 = vmatprep.subr.mxu0 0.0
        %1418 = vmatpush1.msra.mxu0 0.0
        %1419 = vmatprep.subr.mxu0 0.0
        %1420 = vmatpush1.msra.mxu0 0.0
        %1421 = vmatprep.subr.mxu0 0.0
        %1422 = vmatpush1.msra.mxu0 0.0
        %1423 = vmatprep.subr.mxu0 0.0
        %1424 = vmatpush1.msra.mxu0 0.0
        %1425 = vmatprep.subr.mxu0 0.0
        %1426 = vmatpush1.msra.mxu0 0.0
        %1427 = vmatprep.subr.mxu0 0.0
        %1428 = vmatpush1.msra.mxu0 0.0
        %1429 = vmatprep.subr.mxu0 0.0
        %1430 = vmatpush1.msra.mxu0 0.0
        %1431 = vmatprep.subr.mxu0 0.0
        %1432 = vmatpush1.msra.mxu0 0.0
        %1433 = vmatprep.subr.mxu0 0.0
        %1434 = vmatpush1.msra.mxu0 0.0
        %1435 = vmatprep.subr.mxu0 0.0
        %1436 = vmatpush1.msra.mxu0 0.0
        %1437 = vmatprep.subr.mxu0 0.0
        %1438 = vmatpush1.msra.mxu0 0.0
        %1439 = vmatprep.subr.mxu0 0.0
        %1440 = vmatpush1.msra.mxu0 0.0
        %1441 = vmatprep.subr.mxu0 0.0
        %1442 = vmatpush1.msra.mxu0 0.0
        %1443 = vmatprep.subr.mxu0 0.0
        %1444 = vmatpush1.msra.mxu0 0.0
        %1445 = vmatprep.subr.mxu0 0.0
        %1446 = vmatpush1.msra.mxu0 0.0
        %1447 = vmatprep.subr.mxu0 0.0
        %1448 = vmatpush1.msra.mxu0 0.0
        %1449 = vmatprep.subr.mxu0 0.0
        %1450 = vmatpush1.msra.mxu0 0.0
        %1451 = vmatprep.subr.mxu0 0.0
        %1452 = vmatpush1.msra.mxu0 0.0
        %1453 = vmatprep.subr.mxu0 0.0
        %1454 = vmatpush1.msra.mxu0 0.0
        %1455 = vmatprep.subr.mxu0 0.0
        %1456 = vmatpush1.msra.mxu0 0.0
        %1457 = vmatprep.subr.mxu0 0.0
        %1458 = vmatpush1.msra.mxu0 0.0
        %1459 = vmatprep.subr.mxu0 0.0
        %1460 = vmatpush1.msra.mxu0 0.0
        %1461 = vmatprep.subr.mxu0 0.0
        %1462 = vmatpush1.msra.mxu0 0.0
        %1463 = vmatprep.subr.mxu0 0.0
        %1464 = vmatpush1.msra.mxu0 0.0
        %1465 = vmatprep.subr.mxu0 0.0
        %1466 = vmatpush1.msra.mxu0 0.0
        %1467 = vmatprep.subr.mxu0 0.0
        %1468 = vmatpush1.msra.mxu0 0.0
        %1469 = vmatprep.subr.mxu0 0.0
        %1470 = vmatpush1.msra.mxu0 0.0
        %1471 = vmatprep.mubr.f32.mxu0 0.0
        %1472 = vmatmul.mubr.f32.gmra.mrb[0].mxu0 %v1399
        %v1473 = vpop.f32.mrb[0].mxu0
        %v1474 = vadd.f32 0.0, %v1473
        %v1475 = vpop.f32.mrb[0].mxu0
        %v1476 = vadd.f32 0.0, %v1475
        %1477 = vdwg.mxu0
        %v1478 = vadd.f32 %v1384, %v1474
        %v1479 = vadd.f32 %v1386, %v1476
        %s1480 = scalar_lea.vmem %s2, 12
        %v1481 = vld [vmem:[%s1480] sm:$0xf]
        %1482 = vrot.lane.b32.xlu0 %v1207, 1
        %v1483 = vpop.permute.xlu0 %1482
        %1484 = vrot.lane.b32.xlu0 %v1208, 1
        %v1485 = vpop.permute.xlu0 %1484
        %v1486 = vsel %vm587, %v1483, %v1485
        %v1487 = vsel %vm587, %v1485, %v1483
        %v1488 = vmul.f32 %v1487, %v596
        %v1489 = vmul.f32 %v1486, %v600
        %v1491 = vsel %vm313, %v1481, 0
        %v1494 = vsel %vm317, %v1488, 0
        %v1497 = vsel %vm317, %v1489, 0
        %1499 = vmatprep.subr.mxu0 %v1497
        %1500 = vmatpush1.msra.mxu0 %v1494
        %1501 = vmatprep.subr.mxu0 0.0
        %1502 = vmatpush1.msra.mxu0 0.0
        %1503 = vmatprep.subr.mxu0 0.0
        %1504 = vmatpush1.msra.mxu0 0.0
        %1505 = vmatprep.subr.mxu0 0.0
        %1506 = vmatpush1.msra.mxu0 0.0
        %1507 = vmatprep.subr.mxu0 0.0
        %1508 = vmatpush1.msra.mxu0 0.0
        %1509 = vmatprep.subr.mxu0 0.0
        %1510 = vmatpush1.msra.mxu0 0.0
        %1511 = vmatprep.subr.mxu0 0.0
        %1512 = vmatpush1.msra.mxu0 0.0
        %1513 = vmatprep.subr.mxu0 0.0
        %1514 = vmatpush1.msra.mxu0 0.0
        %1515 = vmatprep.subr.mxu0 0.0
        %1516 = vmatpush1.msra.mxu0 0.0
        %1517 = vmatprep.subr.mxu0 0.0
        %1518 = vmatpush1.msra.mxu0 0.0
        %1519 = vmatprep.subr.mxu0 0.0
        %1520 = vmatpush1.msra.mxu0 0.0
        %1521 = vmatprep.subr.mxu0 0.0
        %1522 = vmatpush1.msra.mxu0 0.0
        %1523 = vmatprep.subr.mxu0 0.0
        %1524 = vmatpush1.msra.mxu0 0.0
        %1525 = vmatprep.subr.mxu0 0.0
        %1526 = vmatpush1.msra.mxu0 0.0
        %1527 = vmatprep.subr.mxu0 0.0
        %1528 = vmatpush1.msra.mxu0 0.0
        %1529 = vmatprep.subr.mxu0 0.0
        %1530 = vmatpush1.msra.mxu0 0.0
        %1531 = vmatprep.subr.mxu0 0.0
        %1532 = vmatpush1.msra.mxu0 0.0
        %1533 = vmatprep.subr.mxu0 0.0
        %1534 = vmatpush1.msra.mxu0 0.0
        %1535 = vmatprep.subr.mxu0 0.0
        %1536 = vmatpush1.msra.mxu0 0.0
        %1537 = vmatprep.subr.mxu0 0.0
        %1538 = vmatpush1.msra.mxu0 0.0
        %1539 = vmatprep.subr.mxu0 0.0
        %1540 = vmatpush1.msra.mxu0 0.0
        %1541 = vmatprep.subr.mxu0 0.0
        %1542 = vmatpush1.msra.mxu0 0.0
        %1543 = vmatprep.subr.mxu0 0.0
        %1544 = vmatpush1.msra.mxu0 0.0
        %1545 = vmatprep.subr.mxu0 0.0
        %1546 = vmatpush1.msra.mxu0 0.0
        %1547 = vmatprep.subr.mxu0 0.0
        %1548 = vmatpush1.msra.mxu0 0.0
        %1549 = vmatprep.subr.mxu0 0.0
        %1550 = vmatpush1.msra.mxu0 0.0
        %1551 = vmatprep.subr.mxu0 0.0
        %1552 = vmatpush1.msra.mxu0 0.0
        %1553 = vmatprep.subr.mxu0 0.0
        %1554 = vmatpush1.msra.mxu0 0.0
        %1555 = vmatprep.subr.mxu0 0.0
        %1556 = vmatpush1.msra.mxu0 0.0
        %1557 = vmatprep.subr.mxu0 0.0
        %1558 = vmatpush1.msra.mxu0 0.0
        %1559 = vmatprep.subr.mxu0 0.0
        %1560 = vmatpush1.msra.mxu0 0.0
        %1561 = vmatprep.subr.mxu0 0.0
        %1562 = vmatpush1.msra.mxu0 0.0
        %1563 = vmatprep.mubr.f32.mxu0 0.0
        %1564 = vmatmul.mubr.f32.gmra.mrb[0].mxu0 %v1491
        %v1565 = vpop.f32.mrb[0].mxu0
        %v1566 = vadd.f32 0.0, %v1565
        %v1567 = vpop.f32.mrb[0].mxu0
        %v1568 = vadd.f32 0.0, %v1567
        %1569 = vdwg.mxu0
        %v1570 = vadd.f32 %v1478, %v1566
        %v1571 = vadd.f32 %v1479, %v1568
        %s1572 = scalar_lea.vmem %s2, 16
        %v1573 = vld [vmem:[%s1572] sm:$0xf]
        %v1575 = vsel %vm313, %v1573, 0
        %v1578 = vsel %vm317, %v1207, 0
        %v1581 = vsel %vm317, %v1208, 0
        %1583 = vmatprep.subr.mxu0 %v1581
        %1584 = vmatpush1.msra.mxu0 %v1578
        %1585 = vmatprep.subr.mxu0 0.0
        %1586 = vmatpush1.msra.mxu0 0.0
        %1587 = vmatprep.subr.mxu0 0.0
        %1588 = vmatpush1.msra.mxu0 0.0
        %1589 = vmatprep.subr.mxu0 0.0
        %1590 = vmatpush1.msra.mxu0 0.0
        %1591 = vmatprep.subr.mxu0 0.0
        %1592 = vmatpush1.msra.mxu0 0.0
        %1593 = vmatprep.subr.mxu0 0.0
        %1594 = vmatpush1.msra.mxu0 0.0
        %1595 = vmatprep.subr.mxu0 0.0
        %1596 = vmatpush1.msra.mxu0 0.0
        %1597 = vmatprep.subr.mxu0 0.0
        %1598 = vmatpush1.msra.mxu0 0.0
        %1599 = vmatprep.subr.mxu0 0.0
        %1600 = vmatpush1.msra.mxu0 0.0
        %1601 = vmatprep.subr.mxu0 0.0
        %1602 = vmatpush1.msra.mxu0 0.0
        %1603 = vmatprep.subr.mxu0 0.0
        %1604 = vmatpush1.msra.mxu0 0.0
        %1605 = vmatprep.subr.mxu0 0.0
        %1606 = vmatpush1.msra.mxu0 0.0
        %1607 = vmatprep.subr.mxu0 0.0
        %1608 = vmatpush1.msra.mxu0 0.0
        %1609 = vmatprep.subr.mxu0 0.0
        %1610 = vmatpush1.msra.mxu0 0.0
        %1611 = vmatprep.subr.mxu0 0.0
        %1612 = vmatpush1.msra.mxu0 0.0
        %1613 = vmatprep.subr.mxu0 0.0
        %1614 = vmatpush1.msra.mxu0 0.0
        %1615 = vmatprep.subr.mxu0 0.0
        %1616 = vmatpush1.msra.mxu0 0.0
        %1617 = vmatprep.subr.mxu0 0.0
        %1618 = vmatpush1.msra.mxu0 0.0
        %1619 = vmatprep.subr.mxu0 0.0
        %1620 = vmatpush1.msra.mxu0 0.0
        %1621 = vmatprep.subr.mxu0 0.0
        %1622 = vmatpush1.msra.mxu0 0.0
        %1623 = vmatprep.subr.mxu0 0.0
        %1624 = vmatpush1.msra.mxu0 0.0
        %1625 = vmatprep.subr.mxu0 0.0
        %1626 = vmatpush1.msra.mxu0 0.0
        %1627 = vmatprep.subr.mxu0 0.0
        %1628 = vmatpush1.msra.mxu0 0.0
        %1629 = vmatprep.subr.mxu0 0.0
        %1630 = vmatpush1.msra.mxu0 0.0
        %1631 = vmatprep.subr.mxu0 0.0
        %1632 = vmatpush1.msra.mxu0 0.0
        %1633 = vmatprep.subr.mxu0 0.0
        %1634 = vmatpush1.msra.mxu0 0.0
        %1635 = vmatprep.subr.mxu0 0.0
        %1636 = vmatpush1.msra.mxu0 0.0
        %1637 = vmatprep.subr.mxu0 0.0
        %1638 = vmatpush1.msra.mxu0 0.0
        %1639 = vmatprep.subr.mxu0 0.0
        %1640 = vmatpush1.msra.mxu0 0.0
        %1641 = vmatprep.subr.mxu0 0.0
        %1642 = vmatpush1.msra.mxu0 0.0
        %1643 = vmatprep.subr.mxu0 0.0
        %1644 = vmatpush1.msra.mxu0 0.0
        %1645 = vmatprep.subr.mxu0 0.0
        %1646 = vmatpush1.msra.mxu0 0.0
        %1647 = vmatprep.mubr.f32.mxu0 0.0
        %1648 = vmatmul.mubr.f32.gmra.mrb[0].mxu0 %v1575
        %v1649 = vpop.f32.mrb[0].mxu0
        %v1650 = vadd.f32 0.0, %v1649
        %v1651 = vpop.f32.mrb[0].mxu0
        %v1652 = vadd.f32 0.0, %v1651
        %1653 = vdwg.mxu0
        %v1654 = vadd.f32 %v1570, %v1650
        %v1655 = vadd.f32 %v1571, %v1652
        %s1656 = scalar_lea.vmem %s2, 20
        %v1657 = vld [vmem:[%s1656] sm:$0xf]
        %1658 = vrot.lane.b32.xlu0 %v1207, 127
        %v1659 = vpop.permute.xlu0 %1658
        %1660 = vrot.lane.b32.xlu0 %v1208, 127
        %v1661 = vpop.permute.xlu0 %1660
        %v1662 = vsel %vm775, %v1659, %v1661
        %v1663 = vsel %vm775, %v1661, %v1659
        %v1664 = vmul.f32 %v1662, %v784
        %v1665 = vmul.f32 %v1663, %v788
        %v1667 = vsel %vm313, %v1657, 0
        %v1670 = vsel %vm317, %v1664, 0
        %v1673 = vsel %vm317, %v1665, 0
        %1675 = vmatprep.subr.mxu0 %v1673
        %1676 = vmatpush1.msra.mxu0 %v1670
        %1677 = vmatprep.subr.mxu0 0.0
        %1678 = vmatpush1.msra.mxu0 0.0
        %1679 = vmatprep.subr.mxu0 0.0
        %1680 = vmatpush1.msra.mxu0 0.0
        %1681 = vmatprep.subr.mxu0 0.0
        %1682 = vmatpush1.msra.mxu0 0.0
        %1683 = vmatprep.subr.mxu0 0.0
        %1684 = vmatpush1.msra.mxu0 0.0
        %1685 = vmatprep.subr.mxu0 0.0
        %1686 = vmatpush1.msra.mxu0 0.0
        %1687 = vmatprep.subr.mxu0 0.0
        %1688 = vmatpush1.msra.mxu0 0.0
        %1689 = vmatprep.subr.mxu0 0.0
        %1690 = vmatpush1.msra.mxu0 0.0
        %1691 = vmatprep.subr.mxu0 0.0
        %1692 = vmatpush1.msra.mxu0 0.0
        %1693 = vmatprep.subr.mxu0 0.0
        %1694 = vmatpush1.msra.mxu0 0.0
        %1695 = vmatprep.subr.mxu0 0.0
        %1696 = vmatpush1.msra.mxu0 0.0
        %1697 = vmatprep.subr.mxu0 0.0
        %1698 = vmatpush1.msra.mxu0 0.0
        %1699 = vmatprep.subr.mxu0 0.0
        %1700 = vmatpush1.msra.mxu0 0.0
        %1701 = vmatprep.subr.mxu0 0.0
        %1702 = vmatpush1.msra.mxu0 0.0
        %1703 = vmatprep.subr.mxu0 0.0
        %1704 = vmatpush1.msra.mxu0 0.0
        %1705 = vmatprep.subr.mxu0 0.0
        %1706 = vmatpush1.msra.mxu0 0.0
        %1707 = vmatprep.subr.mxu0 0.0
        %1708 = vmatpush1.msra.mxu0 0.0
        %1709 = vmatprep.subr.mxu0 0.0
        %1710 = vmatpush1.msra.mxu0 0.0
        %1711 = vmatprep.subr.mxu0 0.0
        %1712 = vmatpush1.msra.mxu0 0.0
        %1713 = vmatprep.subr.mxu0 0.0
        %1714 = vmatpush1.msra.mxu0 0.0
        %1715 = vmatprep.subr.mxu0 0.0
        %1716 = vmatpush1.msra.mxu0 0.0
        %1717 = vmatprep.subr.mxu0 0.0
        %1718 = vmatpush1.msra.mxu0 0.0
        %1719 = vmatprep.subr.mxu0 0.0
        %1720 = vmatpush1.msra.mxu0 0.0
        %1721 = vmatprep.subr.mxu0 0.0
        %1722 = vmatpush1.msra.mxu0 0.0
        %1723 = vmatprep.subr.mxu0 0.0
        %1724 = vmatpush1.msra.mxu0 0.0
        %1725 = vmatprep.subr.mxu0 0.0
        %1726 = vmatpush1.msra.mxu0 0.0
        %1727 = vmatprep.subr.mxu0 0.0
        %1728 = vmatpush1.msra.mxu0 0.0
        %1729 = vmatprep.subr.mxu0 0.0
        %1730 = vmatpush1.msra.mxu0 0.0
        %1731 = vmatprep.subr.mxu0 0.0
        %1732 = vmatpush1.msra.mxu0 0.0
        %1733 = vmatprep.subr.mxu0 0.0
        %1734 = vmatpush1.msra.mxu0 0.0
        %1735 = vmatprep.subr.mxu0 0.0
        %1736 = vmatpush1.msra.mxu0 0.0
        %1737 = vmatprep.subr.mxu0 0.0
        %1738 = vmatpush1.msra.mxu0 0.0
        %1739 = vmatprep.mubr.f32.mxu0 0.0
        %1740 = vmatmul.mubr.f32.gmra.mrb[0].mxu0 %v1667
        %v1741 = vpop.f32.mrb[0].mxu0
        %v1742 = vadd.f32 0.0, %v1741
        %v1743 = vpop.f32.mrb[0].mxu0
        %v1744 = vadd.f32 0.0, %v1743
        %1745 = vdwg.mxu0
        %v1746 = vadd.f32 %v1654, %v1742
        %v1747 = vadd.f32 %v1655, %v1744
        %s1748 = scalar_lea.vmem %s2, 24
        %v1749 = vld [vmem:[%s1748] sm:$0xf]
        %1750 = vrot.lane.b32.xlu0 %v1207, 113
        %v1751 = vpop.permute.xlu0 %1750
        %1752 = vrot.lane.b32.xlu0 %v1208, 113
        %v1753 = vpop.permute.xlu0 %1752
        %v1754 = vsel %vm881, %v1751, %v1753
        %v1755 = vsel %vm881, %v1753, %v1751
        %v1756 = vmul.f32 %v1754, %v890
        %v1757 = vmul.f32 %v1755, %v894
        %v1759 = vsel %vm313, %v1749, 0
        %v1762 = vsel %vm317, %v1756, 0
        %v1765 = vsel %vm317, %v1757, 0
        %1767 = vmatprep.subr.mxu0 %v1765
        %1768 = vmatpush1.msra.mxu0 %v1762
        %1769 = vmatprep.subr.mxu0 0.0
        %1770 = vmatpush1.msra.mxu0 0.0
        %1771 = vmatprep.subr.mxu0 0.0
        %1772 = vmatpush1.msra.mxu0 0.0
        %1773 = vmatprep.subr.mxu0 0.0
        %1774 = vmatpush1.msra.mxu0 0.0
        %1775 = vmatprep.subr.mxu0 0.0
        %1776 = vmatpush1.msra.mxu0 0.0
        %1777 = vmatprep.subr.mxu0 0.0
        %1778 = vmatpush1.msra.mxu0 0.0
        %1779 = vmatprep.subr.mxu0 0.0
        %1780 = vmatpush1.msra.mxu0 0.0
        %1781 = vmatprep.subr.mxu0 0.0
        %1782 = vmatpush1.msra.mxu0 0.0
        %1783 = vmatprep.subr.mxu0 0.0
        %1784 = vmatpush1.msra.mxu0 0.0
        %1785 = vmatprep.subr.mxu0 0.0
        %1786 = vmatpush1.msra.mxu0 0.0
        %1787 = vmatprep.subr.mxu0 0.0
        %1788 = vmatpush1.msra.mxu0 0.0
        %1789 = vmatprep.subr.mxu0 0.0
        %1790 = vmatpush1.msra.mxu0 0.0
        %1791 = vmatprep.subr.mxu0 0.0
        %1792 = vmatpush1.msra.mxu0 0.0
        %1793 = vmatprep.subr.mxu0 0.0
        %1794 = vmatpush1.msra.mxu0 0.0
        %1795 = vmatprep.subr.mxu0 0.0
        %1796 = vmatpush1.msra.mxu0 0.0
        %1797 = vmatprep.subr.mxu0 0.0
        %1798 = vmatpush1.msra.mxu0 0.0
        %1799 = vmatprep.subr.mxu0 0.0
        %1800 = vmatpush1.msra.mxu0 0.0
        %1801 = vmatprep.subr.mxu0 0.0
        %1802 = vmatpush1.msra.mxu0 0.0
        %1803 = vmatprep.subr.mxu0 0.0
        %1804 = vmatpush1.msra.mxu0 0.0
        %1805 = vmatprep.subr.mxu0 0.0
        %1806 = vmatpush1.msra.mxu0 0.0
        %1807 = vmatprep.subr.mxu0 0.0
        %1808 = vmatpush1.msra.mxu0 0.0
        %1809 = vmatprep.subr.mxu0 0.0
        %1810 = vmatpush1.msra.mxu0 0.0
        %1811 = vmatprep.subr.mxu0 0.0
        %1812 = vmatpush1.msra.mxu0 0.0
        %1813 = vmatprep.subr.mxu0 0.0
        %1814 = vmatpush1.msra.mxu0 0.0
        %1815 = vmatprep.subr.mxu0 0.0
        %1816 = vmatpush1.msra.mxu0 0.0
        %1817 = vmatprep.subr.mxu0 0.0
        %1818 = vmatpush1.msra.mxu0 0.0
        %1819 = vmatprep.subr.mxu0 0.0
        %1820 = vmatpush1.msra.mxu0 0.0
        %1821 = vmatprep.subr.mxu0 0.0
        %1822 = vmatpush1.msra.mxu0 0.0
        %1823 = vmatprep.subr.mxu0 0.0
        %1824 = vmatpush1.msra.mxu0 0.0
        %1825 = vmatprep.subr.mxu0 0.0
        %1826 = vmatpush1.msra.mxu0 0.0
        %1827 = vmatprep.subr.mxu0 0.0
        %1828 = vmatpush1.msra.mxu0 0.0
        %1829 = vmatprep.subr.mxu0 0.0
        %1830 = vmatpush1.msra.mxu0 0.0
        %1831 = vmatprep.mubr.f32.mxu0 0.0
        %1832 = vmatmul.mubr.f32.gmra.mrb[0].mxu0 %v1759
        %v1833 = vpop.f32.mrb[0].mxu0
        %v1834 = vadd.f32 0.0, %v1833
        %v1835 = vpop.f32.mrb[0].mxu0
        %v1836 = vadd.f32 0.0, %v1835
        %1837 = vdwg.mxu0
        %v1838 = vadd.f32 %v1746, %v1834
        %v1839 = vadd.f32 %v1747, %v1836
        %s1840 = scalar_lea.vmem %s2, 28
        %v1841 = vld [vmem:[%s1840] sm:$0xf]
        %1842 = vrot.lane.b32.xlu0 %v1207, 112
        %v1843 = vpop.permute.xlu0 %1842
        %1844 = vrot.lane.b32.xlu0 %v1208, 112
        %v1845 = vpop.permute.xlu0 %1844
        %v1846 = vsel %vm987, %v1843, %v1845
        %v1847 = vsel %vm987, %v1845, %v1843
        %v1848 = vmul.f32 %v1846, %v996
        %v1849 = vmul.f32 %v1847, %v1000
        %v1851 = vsel %vm313, %v1841, 0
        %v1854 = vsel %vm317, %v1848, 0
        %v1857 = vsel %vm317, %v1849, 0
        %1859 = vmatprep.subr.mxu0 %v1857
        %1860 = vmatpush1.msra.mxu0 %v1854
        %1861 = vmatprep.subr.mxu0 0.0
        %1862 = vmatpush1.msra.mxu0 0.0
        %1863 = vmatprep.subr.mxu0 0.0
        %1864 = vmatpush1.msra.mxu0 0.0
        %1865 = vmatprep.subr.mxu0 0.0
        %1866 = vmatpush1.msra.mxu0 0.0
        %1867 = vmatprep.subr.mxu0 0.0
        %1868 = vmatpush1.msra.mxu0 0.0
        %1869 = vmatprep.subr.mxu0 0.0
        %1870 = vmatpush1.msra.mxu0 0.0
        %1871 = vmatprep.subr.mxu0 0.0
        %1872 = vmatpush1.msra.mxu0 0.0
        %1873 = vmatprep.subr.mxu0 0.0
        %1874 = vmatpush1.msra.mxu0 0.0
        %1875 = vmatprep.subr.mxu0 0.0
        %1876 = vmatpush1.msra.mxu0 0.0
        %1877 = vmatprep.subr.mxu0 0.0
        %1878 = vmatpush1.msra.mxu0 0.0
        %1879 = vmatprep.subr.mxu0 0.0
        %1880 = vmatpush1.msra.mxu0 0.0
        %1881 = vmatprep.subr.mxu0 0.0
        %1882 = vmatpush1.msra.mxu0 0.0
        %1883 = vmatprep.subr.mxu0 0.0
        %1884 = vmatpush1.msra.mxu0 0.0
        %1885 = vmatprep.subr.mxu0 0.0
        %1886 = vmatpush1.msra.mxu0 0.0
        %1887 = vmatprep.subr.mxu0 0.0
        %1888 = vmatpush1.msra.mxu0 0.0
        %1889 = vmatprep.subr.mxu0 0.0
        %1890 = vmatpush1.msra.mxu0 0.0
        %1891 = vmatprep.subr.mxu0 0.0
        %1892 = vmatpush1.msra.mxu0 0.0
        %1893 = vmatprep.subr.mxu0 0.0
        %1894 = vmatpush1.msra.mxu0 0.0
        %1895 = vmatprep.subr.mxu0 0.0
        %1896 = vmatpush1.msra.mxu0 0.0
        %1897 = vmatprep.subr.mxu0 0.0
        %1898 = vmatpush1.msra.mxu0 0.0
        %1899 = vmatprep.subr.mxu0 0.0
        %1900 = vmatpush1.msra.mxu0 0.0
        %1901 = vmatprep.subr.mxu0 0.0
        %1902 = vmatpush1.msra.mxu0 0.0
        %1903 = vmatprep.subr.mxu0 0.0
        %1904 = vmatpush1.msra.mxu0 0.0
        %1905 = vmatprep.subr.mxu0 0.0
        %1906 = vmatpush1.msra.mxu0 0.0
        %1907 = vmatprep.subr.mxu0 0.0
        %1908 = vmatpush1.msra.mxu0 0.0
        %1909 = vmatprep.subr.mxu0 0.0
        %1910 = vmatpush1.msra.mxu0 0.0
        %1911 = vmatprep.subr.mxu0 0.0
        %1912 = vmatpush1.msra.mxu0 0.0
        %1913 = vmatprep.subr.mxu0 0.0
        %1914 = vmatpush1.msra.mxu0 0.0
        %1915 = vmatprep.subr.mxu0 0.0
        %1916 = vmatpush1.msra.mxu0 0.0
        %1917 = vmatprep.subr.mxu0 0.0
        %1918 = vmatpush1.msra.mxu0 0.0
        %1919 = vmatprep.subr.mxu0 0.0
        %1920 = vmatpush1.msra.mxu0 0.0
        %1921 = vmatprep.subr.mxu0 0.0
        %1922 = vmatpush1.msra.mxu0 0.0
        %1923 = vmatprep.mubr.f32.mxu0 0.0
        %1924 = vmatmul.mubr.f32.gmra.mrb[0].mxu0 %v1851
        %v1925 = vpop.f32.mrb[0].mxu0
        %v1926 = vadd.f32 0.0, %v1925
        %v1927 = vpop.f32.mrb[0].mxu0
        %v1928 = vadd.f32 0.0, %v1927
        %1929 = vdwg.mxu0
        %v1930 = vadd.f32 %v1838, %v1926
        %v1931 = vadd.f32 %v1839, %v1928
        %s1932 = scalar_lea.vmem %s2, 32
        %v1933 = vld [vmem:[%s1932] sm:$0xf]
        %1934 = vrot.lane.b32.xlu0 %v1207, 111
        %v1935 = vpop.permute.xlu0 %1934
        %1936 = vrot.lane.b32.xlu0 %v1208, 111
        %v1937 = vpop.permute.xlu0 %1936
        %v1938 = vsel %vm1093, %v1935, %v1937
        %v1939 = vsel %vm1093, %v1937, %v1935
        %v1940 = vmul.f32 %v1938, %v1102
        %v1941 = vmul.f32 %v1939, %v1106
        %v1943 = vsel %vm313, %v1933, 0
        %v1946 = vsel %vm317, %v1940, 0
        %v1949 = vsel %vm317, %v1941, 0
        %1951 = vmatprep.subr.mxu0 %v1949
        %1952 = vmatpush1.msra.mxu0 %v1946
        %1953 = vmatprep.subr.mxu0 0.0
        %1954 = vmatpush1.msra.mxu0 0.0
        %1955 = vmatprep.subr.mxu0 0.0
        %1956 = vmatpush1.msra.mxu0 0.0
        %1957 = vmatprep.subr.mxu0 0.0
        %1958 = vmatpush1.msra.mxu0 0.0
        %1959 = vmatprep.subr.mxu0 0.0
        %1960 = vmatpush1.msra.mxu0 0.0
        %1961 = vmatprep.subr.mxu0 0.0
        %1962 = vmatpush1.msra.mxu0 0.0
        %1963 = vmatprep.subr.mxu0 0.0
        %1964 = vmatpush1.msra.mxu0 0.0
        %1965 = vmatprep.subr.mxu0 0.0
        %1966 = vmatpush1.msra.mxu0 0.0
        %1967 = vmatprep.subr.mxu0 0.0
        %1968 = vmatpush1.msra.mxu0 0.0
        %1969 = vmatprep.subr.mxu0 0.0
        %1970 = vmatpush1.msra.mxu0 0.0
        %1971 = vmatprep.subr.mxu0 0.0
        %1972 = vmatpush1.msra.mxu0 0.0
        %1973 = vmatprep.subr.mxu0 0.0
        %1974 = vmatpush1.msra.mxu0 0.0
        %1975 = vmatprep.subr.mxu0 0.0
        %1976 = vmatpush1.msra.mxu0 0.0
        %1977 = vmatprep.subr.mxu0 0.0
        %1978 = vmatpush1.msra.mxu0 0.0
        %1979 = vmatprep.subr.mxu0 0.0
        %1980 = vmatpush1.msra.mxu0 0.0
        %1981 = vmatprep.subr.mxu0 0.0
        %1982 = vmatpush1.msra.mxu0 0.0
        %1983 = vmatprep.subr.mxu0 0.0
        %1984 = vmatpush1.msra.mxu0 0.0
        %1985 = vmatprep.subr.mxu0 0.0
        %1986 = vmatpush1.msra.mxu0 0.0
        %1987 = vmatprep.subr.mxu0 0.0
        %1988 = vmatpush1.msra.mxu0 0.0
        %1989 = vmatprep.subr.mxu0 0.0
        %1990 = vmatpush1.msra.mxu0 0.0
        %1991 = vmatprep.subr.mxu0 0.0
        %1992 = vmatpush1.msra.mxu0 0.0
        %1993 = vmatprep.subr.mxu0 0.0
        %1994 = vmatpush1.msra.mxu0 0.0
        %1995 = vmatprep.subr.mxu0 0.0
        %1996 = vmatpush1.msra.mxu0 0.0
        %1997 = vmatprep.subr.mxu0 0.0
        %1998 = vmatpush1.msra.mxu0 0.0
        %1999 = vmatprep.subr.mxu0 0.0
        %2000 = vmatpush1.msra.mxu0 0.0
        %2001 = vmatprep.subr.mxu0 0.0
        %2002 = vmatpush1.msra.mxu0 0.0
        %2003 = vmatprep.subr.mxu0 0.0
        %2004 = vmatpush1.msra.mxu0 0.0
        %2005 = vmatprep.subr.mxu0 0.0
        %2006 = vmatpush1.msra.mxu0 0.0
        %2007 = vmatprep.subr.mxu0 0.0
        %2008 = vmatpush1.msra.mxu0 0.0
        %2009 = vmatprep.subr.mxu0 0.0
        %2010 = vmatpush1.msra.mxu0 0.0
        %2011 = vmatprep.subr.mxu0 0.0
        %2012 = vmatpush1.msra.mxu0 0.0
        %2013 = vmatprep.subr.mxu0 0.0
        %2014 = vmatpush1.msra.mxu0 0.0
        %2015 = vmatprep.mubr.f32.mxu0 0.0
        %2016 = vmatmul.mubr.f32.gmra.mrb[0].mxu0 %v1943
        %v2017 = vpop.f32.mrb[0].mxu0
        %v2018 = vadd.f32 0.0, %v2017
        %v2019 = vpop.f32.mrb[0].mxu0
        %v2020 = vadd.f32 0.0, %v2019
        %2021 = vdwg.mxu0
        %v2022 = vadd.f32 %v1930, %v2018
        %v2023 = vadd.f32 %v1931, %v2020
        %2024 = vset.pattern.permute.xlu0 2
        %2025 = vperm.xlu0 %2024, %v1193
        %v2026 = vpop.permute.xlu0 %2025
        %v2028 = vmul.f32 %v2022, %v2026
        %v2029 = vmul.f32 %v2023, %v2026
        %2030 = vset.pattern.permute.xlu0 3
        %2031 = vperm.xlu0 %2030, %v1193
        %v2032 = vpop.permute.xlu0 %2031
        %v2034 = vadd.f32 %v2028, %v2032
        %v2035 = vadd.f32 %v2029, %v2032
        %v2036 = vadd.f32 %v2034, %v261
        %v2037 = vadd.f32 %v2035, %v264
        %v2040 = vcombine.low %v2036, %v2037
        %2042 = vst [vmem:[%s255] sm:$0xff] %v2040
        %v2043 = vmax.f32 %v261, 0.0
        %2044 = vst [vmem:[%s248] sm:$0xff] %v2043
        %s2045 = sand.u32 %s142, 1
        %s2046 = scalar_lea.sflag [#allocation3], %s2045
        %s2047 = sand.u32 %s142, 1
        %s2048 = smul.addr %s2047, 8
        %s2049 = scalar_lea.vmem [#allocation2], %s2048
        %s2050 = sand.u32 %s168, 1
        %s2051 = scalar_lea.sflag [#allocation5], %s2050
        %s2052 = sand.u32 %s168, 1
        %s2053 = smul.addr %s2052, 8
        %s2054 = scalar_lea.vmem [#allocation4], %s2053
        // Predicated region
        $region41: #{tpu_custom_call.1} parent=39 // pred_check
          %p2055 = pneg %p152
        $region42: #{tpu_custom_call.1} parent=39 // pred_check_branch
          %2057 = sbr.rel (%p2055) target = $region44
        $region43: #{tpu_custom_call.1} parent=39 // pred_region
          %s2059 = ssub.s32 128, 128
          %2060 = vsyncadd %s2046, %s2059
          %s2061 = smul.addr %s24, 2
          %s2062 = smul.addr %s2061, 64
          %s2063 = scalar_lea.hbm %s5, %s2062
          %s2065 = sshll.u32 %s2049, 4
          %s2066 = int_to_ptr.vmem [resolvable:$true] %s2065
          %2068 = dma.vmem_to_hbm [thread:$0]  %s2066, 128, %s2063, %s2046
        $region44: #{tpu_custom_call.1} parent=39 // pred_fallthru
          _
        // Predicated region
        $region45: #{tpu_custom_call.1} parent=39 // pred_check
          %p2069 = pneg %p178
        $region46: #{tpu_custom_call.1} parent=39 // pred_check_branch
          %2071 = sbr.rel (%p2069) target = $region48
        $region47: #{tpu_custom_call.1} parent=39 // pred_region
          %s2073 = ssub.s32 128, 128
          %2074 = vsyncadd %s2051, %s2073
          %s2075 = smul.addr %s24, 2
          %s2076 = smul.addr %s2075, 64
          %s2077 = scalar_lea.hbm %s6, %s2076
          %s2079 = sshll.u32 %s2054, 4
          %s2080 = int_to_ptr.vmem [resolvable:$true] %s2079
          %2082 = dma.vmem_to_hbm [thread:$0]  %s2080, 128, %s2077, %s2051
        $region48: #{tpu_custom_call.1} parent=39 // pred_fallthru
          _
      $region40: #{tpu_custom_call.1} parent=5 // pred_fallthru
        _
      %p2083 = scmp.le.s32.totalorder 2, %s19
      // Predicated region
      $region49: #{tpu_custom_call.1} parent=5 // pred_check
        %p2084 = pneg %p2083
      $region50: #{tpu_custom_call.1} parent=5 // pred_check_branch
        %2086 = sbr.rel (%p2084) target = $region52
      $region51: #{tpu_custom_call.1} parent=5 // pred_region
        %s2087 = ssub.s32 %s19, 2
        // Predicated region
        $region53: #{tpu_custom_call.1} parent=51 // pred_check
          %p2088 = pneg %p158
        $region54: #{tpu_custom_call.1} parent=51 // pred_check_branch
          %2090 = sbr.rel (%p2088) target = $region56
        $region55: #{tpu_custom_call.1} parent=51 // pred_region
          %s2091 = sand.u32 %s143, 1
          %s2092 = scalar_lea.sflag [#allocation3], %s2091
          %s2093 = sand.u32 %s143, 1
          %s2094 = smul.addr %s2093, 8
          %s2095 = scalar_lea.vmem [#allocation2], %s2094
          %2096 = dma.done %s2092, 128
        $region56: #{tpu_custom_call.1} parent=51 // pred_fallthru
          _
        // Predicated region
        $region57: #{tpu_custom_call.1} parent=51 // pred_check
          %p2097 = pneg %p184
        $region58: #{tpu_custom_call.1} parent=51 // pred_check_branch
          %2099 = sbr.rel (%p2097) target = $region60
        $region59: #{tpu_custom_call.1} parent=51 // pred_region
          %s2100 = sand.u32 %s169, 1
          %s2101 = scalar_lea.sflag [#allocation5], %s2100
          %s2102 = sand.u32 %s169, 1
          %s2103 = smul.addr %s2102, 8
          %s2104 = scalar_lea.vmem [#allocation4], %s2103
          %2105 = dma.done %s2101, 128
        $region60: #{tpu_custom_call.1} parent=51 // pred_fallthru
          _
      $region52: #{tpu_custom_call.1} parent=5 // pred_fallthru
        _
    $region6: #{tpu_custom_call.1} parent=1 // loop_footer
      %s23 = sadd.s32 1, %s19
    $region7: #{tpu_custom_call.1} parent=1 // loop_footer_branch
      %18 = sbr.rel target = $region3
    $region8: #{tpu_custom_call.1} parent=1 // loop_exit
      _
    %2106 = vsyncpa [#allocation3], 1
    %s2107 = scalar_lea.sflag [#allocation3], 1
    %2108 = vsyncpa %s2107, 1
    %2109 = vsyncpa [#allocation5], 1
    %s2110 = scalar_lea.sflag [#allocation5], 1
    %2111 = vsyncpa %s2110, 1

</llo_original>
